<compile_context>
chip_gen: v6e
topology: v6e:2x2x1
jax: 0.10.0
libtpu: 0.0.40
codegen_flags: <defaults>
</compile_context>

<pallas_src>
import functools

import numpy as np
import jax
import jax.numpy as jnp
from jax.experimental import pallas as pl
from jax.experimental.pallas import tpu as pltpu


# ------------------------------------------------------------------ kernel
def tree_structure_kernel(xs_ref, init_ref, h_ref, m_ref, chart,
                          *, length, margin, pair_base):
    """Fused constrained + predicted CKY inside pass and per-row hinge/mask.

    xs_ref   : (Bt, P*128)      split scores, pair (lvl,n) at lanes [pair*128, pair*128+128)
    init_ref : (Bt, length*128) constrained chart init (+1000 seeds, -subtract at root)
    h_ref    : (Bt, 1)          per-row hinge contribution (0 for padded rows)
    m_ref    : (Bt, 1)          per-row mask contribution  (0 for padded rows)
    chart    : (2, Bt, length*128) scratch; [0]=constrained, [1]=predicted
    """
    Bt, cols = init_ref.shape

    # --- init both charts (predicted chart is all zeros) -------------------
    chart[0, :, :] = init_ref[...]
    chart[1, :, :] = jnp.zeros((Bt, cols), dtype=jnp.float32)

    # --- fused CKY inside pass ---------------------------------------------
    # Level lvl occupies lanes [lvl*128, lvl*128+128); position p is lane p.
    # Lanes >= (length - lvl) are padding and are never read as valid data.
    for lvl in range(1, length):
        oc = lvl * 128
        best = None
        for n in range(lvl):
            shift = n + 1
            lc = n * 128                               # left child: level n, pos p
            rc = (lvl - n - 1) * 128 + shift           # right child: level lvl-n-1, pos p+n+1
            xc = (pair_base[lvl] + n) * 128            # xs row for (lvl, n)

            ls = chart[:, :, lc:lc + 128]              # (2, Bt, 128), lane-aligned
            rs = chart[:, :, rc:rc + 128]              # (2, Bt, 128), lane-shifted read
            xs = xs_ref[:, xc:xc + 128]                # (Bt, 128), shared by both passes

            ps = ls + rs + xs                          # xs broadcasts over the pass dim
            best = ps if best is None else jnp.maximum(best, ps)

        # constrained half may hold +1000 seeds at this level -> RMW;
        # predicted half starts at zero -> plain write (no RMW).
        chart[0, :, oc:oc + 128] = chart[0, :, oc:oc + 128] + best[0]
        chart[1, :, oc:oc + 128] = best[1]

    # --- per-row hinge / mask -----------------------------------------------
    root = (length - 1) * 128                          # root cell = lane 0 of last level
    constr = chart[0, :, root:root + 1]                # (Bt, 1)  (subtract already folded)
    pred = chart[1, :, root:root + 1]                  # (Bt, 1)
    diff = pred - constr
    mask = (jnp.abs(diff) >= 0.001).astype(jnp.float32)
    hinge = jnp.maximum(margin + diff, 0.0) * mask
    h_ref[...] = hinge
    m_ref[...] = mask


# ------------------------------------------------------------------ wrapper
def _build_xs(s_levels, B, Bp, length):
    """Flatten per-level scores to (Bp, P*128): pair (lvl,n) -> 128 padded lanes."""
    # TODO(synk): produce this layout upstream to avoid the transpose/pad/concat glue.
    parts = []
    for lvl in range(1, length):
        L = length - lvl
        x = s_levels[lvl][..., 0]                      # (B, L, N)
        x = jnp.transpose(x, (0, 2, 1))                # (B, N, L)
        x = jnp.pad(x, ((0, Bp - B), (0, 0), (0, 128 - L)))
        parts.append(x)
    xs = jnp.concatenate(parts, axis=1)                # (Bp, P, 128)
    P = length * (length - 1) // 2
    return xs.reshape(Bp, P * 128).astype(jnp.float32)


def tree_structure_loss(s_levels, constraints, *, batch_size, length,
                        margin=1.0, weight=1.0, batch_tile=8):
    assert 2 <= length <= 128, "level rows are padded to a single 128-lane block"
    Bt = batch_tile
    assert Bt % 8 == 0
    B = batch_size
    Bp = ((B + Bt - 1) // Bt) * Bt
    P = length * (length - 1) // 2
    cols = length * 128
    pair_base = tuple(lvl * (lvl - 1) // 2 for lvl in range(length))

    # Constrained init chart in level-padded layout (host-side, mirrors initial_chart).
    # `subtract` is folded into the root cell so the kernel needs no extra input.
    init_np = np.zeros((Bp, cols), np.float32)
    sub_np = np.zeros((Bp,), np.float32)
    if constraints is not None:
        for idx, spans in enumerate(constraints):
            for (pos, size) in spans:
                level = size - 1
                if level <= 0:
                    continue
                init_np[idx, level * 128 + pos] = 1000.0
                sub_np[idx] += 1000.0
    init_np[:, (length - 1) * 128] -= sub_np
    init_c = jnp.asarray(init_np)

    xs = _build_xs(s_levels, B, Bp, length)
    assert xs.shape == (Bp, P * 128)

    kernel = functools.partial(
        tree_structure_kernel,
        length=length, margin=float(margin), pair_base=pair_base)

    hinge_rows, mask_rows = pl.pallas_call(
        kernel,
        grid=(Bp // Bt,),
        in_specs=[
            pl.BlockSpec((Bt, P * 128), lambda i: (i, 0)),
            pl.BlockSpec((Bt, cols), lambda i: (i, 0)),
        ],
        out_specs=(
            pl.BlockSpec((Bt, 1), lambda i: (i, 0)),
            pl.BlockSpec((Bt, 1), lambda i: (i, 0)),
        ),
        out_shape=(
            jax.ShapeDtypeStruct((Bp, 1), jnp.float32),
            jax.ShapeDtypeStruct((Bp, 1), jnp.float32),
        ),
        scratch_shapes=[pltpu.VMEM((2, Bt, cols), jnp.float32)],
        compiler_params=pltpu.CompilerParams(
            dimension_semantics=("parallel",),
            vmem_limit_bytes=32 * 1024 * 1024),
    )(xs, init_c)

    # Padded rows contribute hinge=0, mask=0, so plain sums are exact.
    hsum = jnp.sum(hinge_rows)
    msum = jnp.sum(mask_rows)
    loss = jnp.where(msum > 0.1, hsum / jnp.maximum(msum, 1.0), hsum)
    return loss * weight


# ------------------------------------------------------------------ numpy reference
def _ref_loss(s_levels_np, constraints, *, B, length, margin, weight):
    offsets = [lvl * length - lvl * (lvl - 1) // 2 for lvl in range(length)]
    ncells = length * (length + 1) // 2

    chart_c = np.zeros((B, ncells), np.float32)
    sub = np.zeros((B, 1), np.float32)
    if constraints is not None:
        for idx, spans in enumerate(constraints):
            for (pos, size) in spans:
                level = size - 1
                if level <= 0:
                    continue
                chart_c[idx, offsets[level] + pos] = 1000.0
                sub[idx, 0] += 1000.0

    def cky(chart0):
        chart = chart0.copy()
        for lvl in range(1, length):
            L = length - lvl
            best = None
            for n in range(lvl):
                ls = chart[:, offsets[n]:offsets[n] + L]
                r0 = offsets[lvl - n - 1] + n + 1
                rs = chart[:, r0:r0 + L]
                xs = s_levels_np[lvl][:, :, n, 0]
                ps = ls + rs + xs
                best = ps if best is None else np.maximum(best, ps)
            chart[:, offsets[lvl]:offsets[lvl] + L] += best
        return chart[:, -1:]

    constr = cky(chart_c) - sub
    pred = cky(np.zeros_like(chart_c))
    diff = pred - constr
    mask = (np.abs(diff) >= 0.001).astype(np.float32)
    hinge = np.maximum(margin + diff, 0.0) * mask
    loss = hinge.sum() / mask.sum() if mask.sum() > 0.1 else hinge.sum()
    return loss * weight


# ------------------------------------------------------------------ main
if __name__ == "__main__":
    B, length = 2, 8
    margin, weight = 1.0, 1.0

    key = jax.random.PRNGKey(0)
    # synthetic "inside_xs_components": s[lvl] has shape (B, length-lvl, lvl, 1)
    s_levels = {}
    for lvl in range(1, length):
        key, sub_key = jax.random.split(key)
        s_levels[lvl] = jax.random.normal(
            sub_key, (B, length - lvl, lvl, 1), dtype=jnp.float32)

    # synthetic constraints: per batch element, list of (pos, span_size)
    constraints = [[(0, 3), (3, 2)], [(1, 4)]]

    loss = tree_structure_loss(
        s_levels, constraints, batch_size=B, length=length,
        margin=margin, weight=weight)
    loss = jax.block_until_ready(loss)

    # correctness check against a pure-numpy reference of the original math
    s_np = {lvl: np.asarray(v) for lvl, v in s_levels.items()}
    ref = _ref_loss(s_np, constraints, B=B, length=length,
                    margin=margin, weight=weight)
    np.testing.assert_allclose(np.asarray(loss), np.float32(ref),
                               rtol=1e-4, atol=1e-2)
    print("KERNEL_OK")
</pallas_src>

<mosaic_0001>
module attributes {stable_mosaic.version = 11 : i64} {
  func.func @tree_structure_kernel(%arg0: i32, %arg1: memref<8x3584xf32, #tpu.memory_space<vmem>>, %arg2: memref<8x1024xf32, #tpu.memory_space<vmem>>, %arg3: memref<8x1xf32, #tpu.memory_space<vmem>>, %arg4: memref<8x1xf32, #tpu.memory_space<vmem>>, %arg5: memref<2x8x1024xf32, #tpu.memory_space<vmem>>) attributes {dimension_semantics = [#tpu.dimension_semantics<parallel>], iteration_bounds = array<i64: 1>, scalar_prefetch = 0 : i64, scratch_operands = 1 : i64, tpu.core_type = #tpu.core_type<tc>, window_params = [{transform_indices = @transform_0, window_bounds = array<i64: 8, 3584>}, {transform_indices = @transform_1, window_bounds = array<i64: 8, 1024>}, {transform_indices = @transform_2, window_bounds = array<i64: 8, 1>}, {transform_indices = @transform_3, window_bounds = array<i64: 8, 1>}]} {
    %c0 = arith.constant 0 : index
    %c0_0 = arith.constant 0 : index
    %0 = vector.load %arg2[%c0, %c0_0] : memref<8x1024xf32, #tpu.memory_space<vmem>>, vector<8x1024xf32>
    %c0_1 = arith.constant 0 : index
    %c0_2 = arith.constant 0 : index
    %c0_3 = arith.constant 0 : index
    %1 = vector.load %arg5[%c0_1, %c0_2, %c0_3] : memref<2x8x1024xf32, #tpu.memory_space<vmem>>, vector<1x8x1024xf32>
    %2 = vector.shape_cast %1 : vector<1x8x1024xf32> to vector<8x1024xf32>
    %3 = vector.shape_cast %0 : vector<8x1024xf32> to vector<1x8x1024xf32>
    tpu.vector_store %arg5[%c0_1, %c0_2, %c0_3], %3 {strides = array<i32>} : memref<2x8x1024xf32, #tpu.memory_space<vmem>>, vector<1x8x1024xf32>,
    %cst = arith.constant 0.000000e+00 : f32
    %4 = vector.broadcast %cst : f32 to vector<8x1024xf32>
    %c1 = arith.constant 1 : index
    %c0_4 = arith.constant 0 : index
    %c0_5 = arith.constant 0 : index
    %5 = vector.load %arg5[%c1, %c0_4, %c0_5] : memref<2x8x1024xf32, #tpu.memory_space<vmem>>, vector<1x8x1024xf32>
    %6 = vector.shape_cast %5 : vector<1x8x1024xf32> to vector<8x1024xf32>
    %7 = vector.shape_cast %4 : vector<8x1024xf32> to vector<1x8x1024xf32>
    tpu.vector_store %arg5[%c1, %c0_4, %c0_5], %7 {strides = array<i32>} : memref<2x8x1024xf32, #tpu.memory_space<vmem>>, vector<1x8x1024xf32>,
    %c0_6 = arith.constant 0 : index
    %c0_7 = arith.constant 0 : index
    %c0_8 = arith.constant 0 : index
    %8 = vector.load %arg5[%c0_6, %c0_7, %c0_8] : memref<2x8x1024xf32, #tpu.memory_space<vmem>>, vector<2x8x128xf32>
    %c0_9 = arith.constant 0 : index
    %c0_10 = arith.constant 0 : index
    %c1_11 = arith.constant 1 : index
    %9 = vector.load %arg5[%c0_9, %c0_10, %c1_11] : memref<2x8x1024xf32, #tpu.memory_space<vmem>>, vector<2x8x128xf32>
    %c0_12 = arith.constant 0 : index
    %c0_13 = arith.constant 0 : index
    %10 = vector.load %arg1[%c0_12, %c0_13] : memref<8x3584xf32, #tpu.memory_space<vmem>>, vector<8x128xf32>
    %11 = arith.addf %8, %9 : vector<2x8x128xf32>
    %12 = vector.shape_cast %10 : vector<8x128xf32> to vector<1x8x128xf32>
    %13 = vector.broadcast %12 : vector<1x8x128xf32> to vector<2x8x128xf32>
    %14 = arith.addf %11, %13 : vector<2x8x128xf32>
    %c0_14 = arith.constant 0 : index
    %c0_15 = arith.constant 0 : index
    %c128 = arith.constant 128 : index
    %15 = vector.load %arg5[%c0_14, %c0_15, %c128] : memref<2x8x1024xf32, #tpu.memory_space<vmem>>, vector<1x8x128xf32>
    %16 = vector.shape_cast %15 : vector<1x8x128xf32> to vector<8x128xf32>
    %17 = vector.extract_strided_slice %14 {offsets = [0, 0, 0], sizes = [1, 8, 128], strides = [1, 1, 1]} : vector<2x8x128xf32> to vector<1x8x128xf32>
    %18 = vector.shape_cast %17 : vector<1x8x128xf32> to vector<8x128xf32>
    %19 = arith.addf %16, %18 : vector<8x128xf32>
    %c0_16 = arith.constant 0 : index
    %c0_17 = arith.constant 0 : index
    %c128_18 = arith.constant 128 : index
    %20 = vector.load %arg5[%c0_16, %c0_17, %c128_18] : memref<2x8x1024xf32, #tpu.memory_space<vmem>>, vector<1x8x128xf32>
    %21 = vector.shape_cast %20 : vector<1x8x128xf32> to vector<8x128xf32>
    %22 = vector.shape_cast %19 : vector<8x128xf32> to vector<1x8x128xf32>
    tpu.vector_store %arg5[%c0_16, %c0_17, %c128_18], %22 {strides = array<i32>} : memref<2x8x1024xf32, #tpu.memory_space<vmem>>, vector<1x8x128xf32>,
    %23 = vector.extract_strided_slice %14 {offsets = [1, 0, 0], sizes = [1, 8, 128], strides = [1, 1, 1]} : vector<2x8x128xf32> to vector<1x8x128xf32>
    %24 = vector.shape_cast %23 : vector<1x8x128xf32> to vector<8x128xf32>
    %c1_19 = arith.constant 1 : index
    %c0_20 = arith.constant 0 : index
    %c128_21 = arith.constant 128 : index
    %25 = vector.load %arg5[%c1_19, %c0_20, %c128_21] : memref<2x8x1024xf32, #tpu.memory_space<vmem>>, vector<1x8x128xf32>
    %26 = vector.shape_cast %25 : vector<1x8x128xf32> to vector<8x128xf32>
    %27 = vector.shape_cast %24 : vector<8x128xf32> to vector<1x8x128xf32>
    tpu.vector_store %arg5[%c1_19, %c0_20, %c128_21], %27 {strides = array<i32>} : memref<2x8x1024xf32, #tpu.memory_space<vmem>>, vector<1x8x128xf32>,
    %c0_22 = arith.constant 0 : index
    %c0_23 = arith.constant 0 : index
    %c0_24 = arith.constant 0 : index
    %28 = vector.load %arg5[%c0_22, %c0_23, %c0_24] : memref<2x8x1024xf32, #tpu.memory_space<vmem>>, vector<2x8x128xf32>
    %c0_25 = arith.constant 0 : index
    %c0_26 = arith.constant 0 : index
    %c129 = arith.constant 129 : index
    %29 = vector.load %arg5[%c0_25, %c0_26, %c129] : memref<2x8x1024xf32, #tpu.memory_space<vmem>>, vector<2x8x128xf32>
    %c0_27 = arith.constant 0 : index
    %c128_28 = arith.constant 128 : index
    %30 = vector.load %arg1[%c0_27, %c128_28] : memref<8x3584xf32, #tpu.memory_space<vmem>>, vector<8x128xf32>
    %31 = arith.addf %28, %29 : vector<2x8x128xf32>
    %32 = vector.shape_cast %30 : vector<8x128xf32> to vector<1x8x128xf32>
    %33 = vector.broadcast %32 : vector<1x8x128xf32> to vector<2x8x128xf32>
    %34 = arith.addf %31, %33 : vector<2x8x128xf32>
    %c0_29 = arith.constant 0 : index
    %c0_30 = arith.constant 0 : index
    %c128_31 = arith.constant 128 : index
    %35 = vector.load %arg5[%c0_29, %c0_30, %c128_31] : memref<2x8x1024xf32, #tpu.memory_space<vmem>>, vector<2x8x128xf32>
    %c0_32 = arith.constant 0 : index
    %c0_33 = arith.constant 0 : index
    %c2 = arith.constant 2 : index
    %36 = vector.load %arg5[%c0_32, %c0_33, %c2] : memref<2x8x1024xf32, #tpu.memory_space<vmem>>, vector<2x8x128xf32>
    %c0_34 = arith.constant 0 : index
    %c256 = arith.constant 256 : index
    %37 = vector.load %arg1[%c0_34, %c256] : memref<8x3584xf32, #tpu.memory_space<vmem>>, vector<8x128xf32>
    %38 = arith.addf %35, %36 : vector<2x8x128xf32>
    %39 = vector.shape_cast %37 : vector<8x128xf32> to vector<1x8x128xf32>
    %40 = vector.broadcast %39 : vector<1x8x128xf32> to vector<2x8x128xf32>
    %41 = arith.addf %38, %40 : vector<2x8x128xf32>
    %42 = arith.maximumf %34, %41 : vector<2x8x128xf32>
    %c0_35 = arith.constant 0 : index
    %c0_36 = arith.constant 0 : index
    %c256_37 = arith.constant 256 : index
    %43 = vector.load %arg5[%c0_35, %c0_36, %c256_37] : memref<2x8x1024xf32, #tpu.memory_space<vmem>>, vector<1x8x128xf32>
    %44 = vector.shape_cast %43 : vector<1x8x128xf32> to vector<8x128xf32>
    %45 = vector.extract_strided_slice %42 {offsets = [0, 0, 0], sizes = [1, 8, 128], strides = [1, 1, 1]} : vector<2x8x128xf32> to vector<1x8x128xf32>
    %46 = vector.shape_cast %45 : vector<1x8x128xf32> to vector<8x128xf32>
    %47 = arith.addf %44, %46 : vector<8x128xf32>
    %c0_38 = arith.constant 0 : index
    %c0_39 = arith.constant 0 : index
    %c256_40 = arith.constant 256 : index
    %48 = vector.load %arg5[%c0_38, %c0_39, %c256_40] : memref<2x8x1024xf32, #tpu.memory_space<vmem>>, vector<1x8x128xf32>
    %49 = vector.shape_cast %48 : vector<1x8x128xf32> to vector<8x128xf32>
    %50 = vector.shape_cast %47 : vector<8x128xf32> to vector<1x8x128xf32>
    tpu.vector_store %arg5[%c0_38, %c0_39, %c256_40], %50 {strides = array<i32>} : memref<2x8x1024xf32, #tpu.memory_space<vmem>>, vector<1x8x128xf32>,
    %51 = vector.extract_strided_slice %42 {offsets = [1, 0, 0], sizes = [1, 8, 128], strides = [1, 1, 1]} : vector<2x8x128xf32> to vector<1x8x128xf32>
    %52 = vector.shape_cast %51 : vector<1x8x128xf32> to vector<8x128xf32>
    %c1_41 = arith.constant 1 : index
    %c0_42 = arith.constant 0 : index
    %c256_43 = arith.constant 256 : index
    %53 = vector.load %arg5[%c1_41, %c0_42, %c256_43] : memref<2x8x1024xf32, #tpu.memory_space<vmem>>, vector<1x8x128xf32>
    %54 = vector.shape_cast %53 : vector<1x8x128xf32> to vector<8x128xf32>
    %55 = vector.shape_cast %52 : vector<8x128xf32> to vector<1x8x128xf32>
    tpu.vector_store %arg5[%c1_41, %c0_42, %c256_43], %55 {strides = array<i32>} : memref<2x8x1024xf32, #tpu.memory_space<vmem>>, vector<1x8x128xf32>,
    %c0_44 = arith.constant 0 : index
    %c0_45 = arith.constant 0 : index
    %c0_46 = arith.constant 0 : index
    %56 = vector.load %arg5[%c0_44, %c0_45, %c0_46] : memref<2x8x1024xf32, #tpu.memory_space<vmem>>, vector<2x8x128xf32>
    %c0_47 = arith.constant 0 : index
    %c0_48 = arith.constant 0 : index
    %c257 = arith.constant 257 : index
    %57 = vector.load %arg5[%c0_47, %c0_48, %c257] : memref<2x8x1024xf32, #tpu.memory_space<vmem>>, vector<2x8x128xf32>
    %c0_49 = arith.constant 0 : index
    %c384 = arith.constant 384 : index
    %58 = vector.load %arg1[%c0_49, %c384] : memref<8x3584xf32, #tpu.memory_space<vmem>>, vector<8x128xf32>
    %59 = arith.addf %56, %57 : vector<2x8x128xf32>
    %60 = vector.shape_cast %58 : vector<8x128xf32> to vector<1x8x128xf32>
    %61 = vector.broadcast %60 : vector<1x8x128xf32> to vector<2x8x128xf32>
    %62 = arith.addf %59, %61 : vector<2x8x128xf32>
    %c0_50 = arith.constant 0 : index
    %c0_51 = arith.constant 0 : index
    %c128_52 = arith.constant 128 : index
    %63 = vector.load %arg5[%c0_50, %c0_51, %c128_52] : memref<2x8x1024xf32, #tpu.memory_space<vmem>>, vector<2x8x128xf32>
    %c0_53 = arith.constant 0 : index
    %c0_54 = arith.constant 0 : index
    %c130 = arith.constant 130 : index
    %64 = vector.load %arg5[%c0_53, %c0_54, %c130] : memref<2x8x1024xf32, #tpu.memory_space<vmem>>, vector<2x8x128xf32>
    %c0_55 = arith.constant 0 : index
    %c512 = arith.constant 512 : index
    %65 = vector.load %arg1[%c0_55, %c512] : memref<8x3584xf32, #tpu.memory_space<vmem>>, vector<8x128xf32>
    %66 = arith.addf %63, %64 : vector<2x8x128xf32>
    %67 = vector.shape_cast %65 : vector<8x128xf32> to vector<1x8x128xf32>
    %68 = vector.broadcast %67 : vector<1x8x128xf32> to vector<2x8x128xf32>
    %69 = arith.addf %66, %68 : vector<2x8x128xf32>
    %70 = arith.maximumf %62, %69 : vector<2x8x128xf32>
    %c0_56 = arith.constant 0 : index
    %c0_57 = arith.constant 0 : index
    %c256_58 = arith.constant 256 : index
    %71 = vector.load %arg5[%c0_56, %c0_57, %c256_58] : memref<2x8x1024xf32, #tpu.memory_space<vmem>>, vector<2x8x128xf32>
    %c0_59 = arith.constant 0 : index
    %c0_60 = arith.constant 0 : index
    %c3 = arith.constant 3 : index
    %72 = vector.load %arg5[%c0_59, %c0_60, %c3] : memref<2x8x1024xf32, #tpu.memory_space<vmem>>, vector<2x8x128xf32>
    %c0_61 = arith.constant 0 : index
    %c640 = arith.constant 640 : index
    %73 = vector.load %arg1[%c0_61, %c640] : memref<8x3584xf32, #tpu.memory_space<vmem>>, vector<8x128xf32>
    %74 = arith.addf %71, %72 : vector<2x8x128xf32>
    %75 = vector.shape_cast %73 : vector<8x128xf32> to vector<1x8x128xf32>
    %76 = vector.broadcast %75 : vector<1x8x128xf32> to vector<2x8x128xf32>
    %77 = arith.addf %74, %76 : vector<2x8x128xf32>
    %78 = arith.maximumf %70, %77 : vector<2x8x128xf32>
    %c0_62 = arith.constant 0 : index
    %c0_63 = arith.constant 0 : index
    %c384_64 = arith.constant 384 : index
    %79 = vector.load %arg5[%c0_62, %c0_63, %c384_64] : memref<2x8x1024xf32, #tpu.memory_space<vmem>>, vector<1x8x128xf32>
    %80 = vector.shape_cast %79 : vector<1x8x128xf32> to vector<8x128xf32>
    %81 = vector.extract_strided_slice %78 {offsets = [0, 0, 0], sizes = [1, 8, 128], strides = [1, 1, 1]} : vector<2x8x128xf32> to vector<1x8x128xf32>
    %82 = vector.shape_cast %81 : vector<1x8x128xf32> to vector<8x128xf32>
    %83 = arith.addf %80, %82 : vector<8x128xf32>
    %c0_65 = arith.constant 0 : index
    %c0_66 = arith.constant 0 : index
    %c384_67 = arith.constant 384 : index
    %84 = vector.load %arg5[%c0_65, %c0_66, %c384_67] : memref<2x8x1024xf32, #tpu.memory_space<vmem>>, vector<1x8x128xf32>
    %85 = vector.shape_cast %84 : vector<1x8x128xf32> to vector<8x128xf32>
    %86 = vector.shape_cast %83 : vector<8x128xf32> to vector<1x8x128xf32>
    tpu.vector_store %arg5[%c0_65, %c0_66, %c384_67], %86 {strides = array<i32>} : memref<2x8x1024xf32, #tpu.memory_space<vmem>>, vector<1x8x128xf32>,
    %87 = vector.extract_strided_slice %78 {offsets = [1, 0, 0], sizes = [1, 8, 128], strides = [1, 1, 1]} : vector<2x8x128xf32> to vector<1x8x128xf32>
    %88 = vector.shape_cast %87 : vector<1x8x128xf32> to vector<8x128xf32>
    %c1_68 = arith.constant 1 : index
    %c0_69 = arith.constant 0 : index
    %c384_70 = arith.constant 384 : index
    %89 = vector.load %arg5[%c1_68, %c0_69, %c384_70] : memref<2x8x1024xf32, #tpu.memory_space<vmem>>, vector<1x8x128xf32>
    %90 = vector.shape_cast %89 : vector<1x8x128xf32> to vector<8x128xf32>
    %91 = vector.shape_cast %88 : vector<8x128xf32> to vector<1x8x128xf32>
    tpu.vector_store %arg5[%c1_68, %c0_69, %c384_70], %91 {strides = array<i32>} : memref<2x8x1024xf32, #tpu.memory_space<vmem>>, vector<1x8x128xf32>,
    %c0_71 = arith.constant 0 : index
    %c0_72 = arith.constant 0 : index
    %c0_73 = arith.constant 0 : index
    %92 = vector.load %arg5[%c0_71, %c0_72, %c0_73] : memref<2x8x1024xf32, #tpu.memory_space<vmem>>, vector<2x8x128xf32>
    %c0_74 = arith.constant 0 : index
    %c0_75 = arith.constant 0 : index
    %c385 = arith.constant 385 : index
    %93 = vector.load %arg5[%c0_74, %c0_75, %c385] : memref<2x8x1024xf32, #tpu.memory_space<vmem>>, vector<2x8x128xf32>
    %c0_76 = arith.constant 0 : index
    %c768 = arith.constant 768 : index
    %94 = vector.load %arg1[%c0_76, %c768] : memref<8x3584xf32, #tpu.memory_space<vmem>>, vector<8x128xf32>
    %95 = arith.addf %92, %93 : vector<2x8x128xf32>
    %96 = vector.shape_cast %94 : vector<8x128xf32> to vector<1x8x128xf32>
    %97 = vector.broadcast %96 : vector<1x8x128xf32> to vector<2x8x128xf32>
    %98 = arith.addf %95, %97 : vector<2x8x128xf32>
    %c0_77 = arith.constant 0 : index
    %c0_78 = arith.constant 0 : index
    %c128_79 = arith.constant 128 : index
    %99 = vector.load %arg5[%c0_77, %c0_78, %c128_79] : memref<2x8x1024xf32, #tpu.memory_space<vmem>>, vector<2x8x128xf32>
    %c0_80 = arith.constant 0 : index
    %c0_81 = arith.constant 0 : index
    %c258 = arith.constant 258 : index
    %100 = vector.load %arg5[%c0_80, %c0_81, %c258] : memref<2x8x1024xf32, #tpu.memory_space<vmem>>, vector<2x8x128xf32>
    %c0_82 = arith.constant 0 : index
    %c896 = arith.constant 896 : index
    %101 = vector.load %arg1[%c0_82, %c896] : memref<8x3584xf32, #tpu.memory_space<vmem>>, vector<8x128xf32>
    %102 = arith.addf %99, %100 : vector<2x8x128xf32>
    %103 = vector.shape_cast %101 : vector<8x128xf32> to vector<1x8x128xf32>
    %104 = vector.broadcast %103 : vector<1x8x128xf32> to vector<2x8x128xf32>
    %105 = arith.addf %102, %104 : vector<2x8x128xf32>
    %106 = arith.maximumf %98, %105 : vector<2x8x128xf32>
    %c0_83 = arith.constant 0 : index
    %c0_84 = arith.constant 0 : index
    %c256_85 = arith.constant 256 : index
    %107 = vector.load %arg5[%c0_83, %c0_84, %c256_85] : memref<2x8x1024xf32, #tpu.memory_space<vmem>>, vector<2x8x128xf32>
    %c0_86 = arith.constant 0 : index
    %c0_87 = arith.constant 0 : index
    %c131 = arith.constant 131 : index
    %108 = vector.load %arg5[%c0_86, %c0_87, %c131] : memref<2x8x1024xf32, #tpu.memory_space<vmem>>, vector<2x8x128xf32>
    %c0_88 = arith.constant 0 : index
    %c1024 = arith.constant 1024 : index
    %109 = vector.load %arg1[%c0_88, %c1024] : memref<8x3584xf32, #tpu.memory_space<vmem>>, vector<8x128xf32>
    %110 = arith.addf %107, %108 : vector<2x8x128xf32>
    %111 = vector.shape_cast %109 : vector<8x128xf32> to vector<1x8x128xf32>
    %112 = vector.broadcast %111 : vector<1x8x128xf32> to vector<2x8x128xf32>
    %113 = arith.addf %110, %112 : vector<2x8x128xf32>
    %114 = arith.maximumf %106, %113 : vector<2x8x128xf32>
    %c0_89 = arith.constant 0 : index
    %c0_90 = arith.constant 0 : index
    %c384_91 = arith.constant 384 : index
    %115 = vector.load %arg5[%c0_89, %c0_90, %c384_91] : memref<2x8x1024xf32, #tpu.memory_space<vmem>>, vector<2x8x128xf32>
    %c0_92 = arith.constant 0 : index
    %c0_93 = arith.constant 0 : index
    %c4 = arith.constant 4 : index
    %116 = vector.load %arg5[%c0_92, %c0_93, %c4] : memref<2x8x1024xf32, #tpu.memory_space<vmem>>, vector<2x8x128xf32>
    %c0_94 = arith.constant 0 : index
    %c1152 = arith.constant 1152 : index
    %117 = vector.load %arg1[%c0_94, %c1152] : memref<8x3584xf32, #tpu.memory_space<vmem>>, vector<8x128xf32>
    %118 = arith.addf %115, %116 : vector<2x8x128xf32>
    %119 = vector.shape_cast %117 : vector<8x128xf32> to vector<1x8x128xf32>
    %120 = vector.broadcast %119 : vector<1x8x128xf32> to vector<2x8x128xf32>
    %121 = arith.addf %118, %120 : vector<2x8x128xf32>
    %122 = arith.maximumf %114, %121 : vector<2x8x128xf32>
    %c0_95 = arith.constant 0 : index
    %c0_96 = arith.constant 0 : index
    %c512_97 = arith.constant 512 : index
    %123 = vector.load %arg5[%c0_95, %c0_96, %c512_97] : memref<2x8x1024xf32, #tpu.memory_space<vmem>>, vector<1x8x128xf32>
    %124 = vector.shape_cast %123 : vector<1x8x128xf32> to vector<8x128xf32>
    %125 = vector.extract_strided_slice %122 {offsets = [0, 0, 0], sizes = [1, 8, 128], strides = [1, 1, 1]} : vector<2x8x128xf32> to vector<1x8x128xf32>
    %126 = vector.shape_cast %125 : vector<1x8x128xf32> to vector<8x128xf32>
    %127 = arith.addf %124, %126 : vector<8x128xf32>
    %c0_98 = arith.constant 0 : index
    %c0_99 = arith.constant 0 : index
    %c512_100 = arith.constant 512 : index
    %128 = vector.load %arg5[%c0_98, %c0_99, %c512_100] : memref<2x8x1024xf32, #tpu.memory_space<vmem>>, vector<1x8x128xf32>
    %129 = vector.shape_cast %128 : vector<1x8x128xf32> to vector<8x128xf32>
    %130 = vector.shape_cast %127 : vector<8x128xf32> to vector<1x8x128xf32>
    tpu.vector_store %arg5[%c0_98, %c0_99, %c512_100], %130 {strides = array<i32>} : memref<2x8x1024xf32, #tpu.memory_space<vmem>>, vector<1x8x128xf32>,
    %131 = vector.extract_strided_slice %122 {offsets = [1, 0, 0], sizes = [1, 8, 128], strides = [1, 1, 1]} : vector<2x8x128xf32> to vector<1x8x128xf32>
    %132 = vector.shape_cast %131 : vector<1x8x128xf32> to vector<8x128xf32>
    %c1_101 = arith.constant 1 : index
    %c0_102 = arith.constant 0 : index
    %c512_103 = arith.constant 512 : index
    %133 = vector.load %arg5[%c1_101, %c0_102, %c512_103] : memref<2x8x1024xf32, #tpu.memory_space<vmem>>, vector<1x8x128xf32>
    %134 = vector.shape_cast %133 : vector<1x8x128xf32> to vector<8x128xf32>
    %135 = vector.shape_cast %132 : vector<8x128xf32> to vector<1x8x128xf32>
    tpu.vector_store %arg5[%c1_101, %c0_102, %c512_103], %135 {strides = array<i32>} : memref<2x8x1024xf32, #tpu.memory_space<vmem>>, vector<1x8x128xf32>,
    %c0_104 = arith.constant 0 : index
    %c0_105 = arith.constant 0 : index
    %c0_106 = arith.constant 0 : index
    %136 = vector.load %arg5[%c0_104, %c0_105, %c0_106] : memref<2x8x1024xf32, #tpu.memory_space<vmem>>, vector<2x8x128xf32>
    %c0_107 = arith.constant 0 : index
    %c0_108 = arith.constant 0 : index
    %c513 = arith.constant 513 : index
    %137 = vector.load %arg5[%c0_107, %c0_108, %c513] : memref<2x8x1024xf32, #tpu.memory_space<vmem>>, vector<2x8x128xf32>
    %c0_109 = arith.constant 0 : index
    %c1280 = arith.constant 1280 : index
    %138 = vector.load %arg1[%c0_109, %c1280] : memref<8x3584xf32, #tpu.memory_space<vmem>>, vector<8x128xf32>
    %139 = arith.addf %136, %137 : vector<2x8x128xf32>
    %140 = vector.shape_cast %138 : vector<8x128xf32> to vector<1x8x128xf32>
    %141 = vector.broadcast %140 : vector<1x8x128xf32> to vector<2x8x128xf32>
    %142 = arith.addf %139, %141 : vector<2x8x128xf32>
    %c0_110 = arith.constant 0 : index
    %c0_111 = arith.constant 0 : index
    %c128_112 = arith.constant 128 : index
    %143 = vector.load %arg5[%c0_110, %c0_111, %c128_112] : memref<2x8x1024xf32, #tpu.memory_space<vmem>>, vector<2x8x128xf32>
    %c0_113 = arith.constant 0 : index
    %c0_114 = arith.constant 0 : index
    %c386 = arith.constant 386 : index
    %144 = vector.load %arg5[%c0_113, %c0_114, %c386] : memref<2x8x1024xf32, #tpu.memory_space<vmem>>, vector<2x8x128xf32>
    %c0_115 = arith.constant 0 : index
    %c1408 = arith.constant 1408 : index
    %145 = vector.load %arg1[%c0_115, %c1408] : memref<8x3584xf32, #tpu.memory_space<vmem>>, vector<8x128xf32>
    %146 = arith.addf %143, %144 : vector<2x8x128xf32>
    %147 = vector.shape_cast %145 : vector<8x128xf32> to vector<1x8x128xf32>
    %148 = vector.broadcast %147 : vector<1x8x128xf32> to vector<2x8x128xf32>
    %149 = arith.addf %146, %148 : vector<2x8x128xf32>
    %150 = arith.maximumf %142, %149 : vector<2x8x128xf32>
    %c0_116 = arith.constant 0 : index
    %c0_117 = arith.constant 0 : index
    %c256_118 = arith.constant 256 : index
    %151 = vector.load %arg5[%c0_116, %c0_117, %c256_118] : memref<2x8x1024xf32, #tpu.memory_space<vmem>>, vector<2x8x128xf32>
    %c0_119 = arith.constant 0 : index
    %c0_120 = arith.constant 0 : index
    %c259 = arith.constant 259 : index
    %152 = vector.load %arg5[%c0_119, %c0_120, %c259] : memref<2x8x1024xf32, #tpu.memory_space<vmem>>, vector<2x8x128xf32>
    %c0_121 = arith.constant 0 : index
    %c1536 = arith.constant 1536 : index
    %153 = vector.load %arg1[%c0_121, %c1536] : memref<8x3584xf32, #tpu.memory_space<vmem>>, vector<8x128xf32>
    %154 = arith.addf %151, %152 : vector<2x8x128xf32>
    %155 = vector.shape_cast %153 : vector<8x128xf32> to vector<1x8x128xf32>
    %156 = vector.broadcast %155 : vector<1x8x128xf32> to vector<2x8x128xf32>
    %157 = arith.addf %154, %156 : vector<2x8x128xf32>
    %158 = arith.maximumf %150, %157 : vector<2x8x128xf32>
    %c0_122 = arith.constant 0 : index
    %c0_123 = arith.constant 0 : index
    %c384_124 = arith.constant 384 : index
    %159 = vector.load %arg5[%c0_122, %c0_123, %c384_124] : memref<2x8x1024xf32, #tpu.memory_space<vmem>>, vector<2x8x128xf32>
    %c0_125 = arith.constant 0 : index
    %c0_126 = arith.constant 0 : index
    %c132 = arith.constant 132 : index
    %160 = vector.load %arg5[%c0_125, %c0_126, %c132] : memref<2x8x1024xf32, #tpu.memory_space<vmem>>, vector<2x8x128xf32>
    %c0_127 = arith.constant 0 : index
    %c1664 = arith.constant 1664 : index
    %161 = vector.load %arg1[%c0_127, %c1664] : memref<8x3584xf32, #tpu.memory_space<vmem>>, vector<8x128xf32>
    %162 = arith.addf %159, %160 : vector<2x8x128xf32>
    %163 = vector.shape_cast %161 : vector<8x128xf32> to vector<1x8x128xf32>
    %164 = vector.broadcast %163 : vector<1x8x128xf32> to vector<2x8x128xf32>
    %165 = arith.addf %162, %164 : vector<2x8x128xf32>
    %166 = arith.maximumf %158, %165 : vector<2x8x128xf32>
    %c0_128 = arith.constant 0 : index
    %c0_129 = arith.constant 0 : index
    %c512_130 = arith.constant 512 : index
    %167 = vector.load %arg5[%c0_128, %c0_129, %c512_130] : memref<2x8x1024xf32, #tpu.memory_space<vmem>>, vector<2x8x128xf32>
    %c0_131 = arith.constant 0 : index
    %c0_132 = arith.constant 0 : index
    %c5 = arith.constant 5 : index
    %168 = vector.load %arg5[%c0_131, %c0_132, %c5] : memref<2x8x1024xf32, #tpu.memory_space<vmem>>, vector<2x8x128xf32>
    %c0_133 = arith.constant 0 : index
    %c1792 = arith.constant 1792 : index
    %169 = vector.load %arg1[%c0_133, %c1792] : memref<8x3584xf32, #tpu.memory_space<vmem>>, vector<8x128xf32>
    %170 = arith.addf %167, %168 : vector<2x8x128xf32>
    %171 = vector.shape_cast %169 : vector<8x128xf32> to vector<1x8x128xf32>
    %172 = vector.broadcast %171 : vector<1x8x128xf32> to vector<2x8x128xf32>
    %173 = arith.addf %170, %172 : vector<2x8x128xf32>
    %174 = arith.maximumf %166, %173 : vector<2x8x128xf32>
    %c0_134 = arith.constant 0 : index
    %c0_135 = arith.constant 0 : index
    %c640_136 = arith.constant 640 : index
    %175 = vector.load %arg5[%c0_134, %c0_135, %c640_136] : memref<2x8x1024xf32, #tpu.memory_space<vmem>>, vector<1x8x128xf32>
    %176 = vector.shape_cast %175 : vector<1x8x128xf32> to vector<8x128xf32>
    %177 = vector.extract_strided_slice %174 {offsets = [0, 0, 0], sizes = [1, 8, 128], strides = [1, 1, 1]} : vector<2x8x128xf32> to vector<1x8x128xf32>
    %178 = vector.shape_cast %177 : vector<1x8x128xf32> to vector<8x128xf32>
    %179 = arith.addf %176, %178 : vector<8x128xf32>
    %c0_137 = arith.constant 0 : index
    %c0_138 = arith.constant 0 : index
    %c640_139 = arith.constant 640 : index
    %180 = vector.load %arg5[%c0_137, %c0_138, %c640_139] : memref<2x8x1024xf32, #tpu.memory_space<vmem>>, vector<1x8x128xf32>
    %181 = vector.shape_cast %180 : vector<1x8x128xf32> to vector<8x128xf32>
    %182 = vector.shape_cast %179 : vector<8x128xf32> to vector<1x8x128xf32>
    tpu.vector_store %arg5[%c0_137, %c0_138, %c640_139], %182 {strides = array<i32>} : memref<2x8x1024xf32, #tpu.memory_space<vmem>>, vector<1x8x128xf32>,
    %183 = vector.extract_strided_slice %174 {offsets = [1, 0, 0], sizes = [1, 8, 128], strides = [1, 1, 1]} : vector<2x8x128xf32> to vector<1x8x128xf32>
    %184 = vector.shape_cast %183 : vector<1x8x128xf32> to vector<8x128xf32>
    %c1_140 = arith.constant 1 : index
    %c0_141 = arith.constant 0 : index
    %c640_142 = arith.constant 640 : index
    %185 = vector.load %arg5[%c1_140, %c0_141, %c640_142] : memref<2x8x1024xf32, #tpu.memory_space<vmem>>, vector<1x8x128xf32>
    %186 = vector.shape_cast %185 : vector<1x8x128xf32> to vector<8x128xf32>
    %187 = vector.shape_cast %184 : vector<8x128xf32> to vector<1x8x128xf32>
    tpu.vector_store %arg5[%c1_140, %c0_141, %c640_142], %187 {strides = array<i32>} : memref<2x8x1024xf32, #tpu.memory_space<vmem>>, vector<1x8x128xf32>,
    %c0_143 = arith.constant 0 : index
    %c0_144 = arith.constant 0 : index
    %c0_145 = arith.constant 0 : index
    %188 = vector.load %arg5[%c0_143, %c0_144, %c0_145] : memref<2x8x1024xf32, #tpu.memory_space<vmem>>, vector<2x8x128xf32>
    %c0_146 = arith.constant 0 : index
    %c0_147 = arith.constant 0 : index
    %c641 = arith.constant 641 : index
    %189 = vector.load %arg5[%c0_146, %c0_147, %c641] : memref<2x8x1024xf32, #tpu.memory_space<vmem>>, vector<2x8x128xf32>
    %c0_148 = arith.constant 0 : index
    %c1920 = arith.constant 1920 : index
    %190 = vector.load %arg1[%c0_148, %c1920] : memref<8x3584xf32, #tpu.memory_space<vmem>>, vector<8x128xf32>
    %191 = arith.addf %188, %189 : vector<2x8x128xf32>
    %192 = vector.shape_cast %190 : vector<8x128xf32> to vector<1x8x128xf32>
    %193 = vector.broadcast %192 : vector<1x8x128xf32> to vector<2x8x128xf32>
    %194 = arith.addf %191, %193 : vector<2x8x128xf32>
    %c0_149 = arith.constant 0 : index
    %c0_150 = arith.constant 0 : index
    %c128_151 = arith.constant 128 : index
    %195 = vector.load %arg5[%c0_149, %c0_150, %c128_151] : memref<2x8x1024xf32, #tpu.memory_space<vmem>>, vector<2x8x128xf32>
    %c0_152 = arith.constant 0 : index
    %c0_153 = arith.constant 0 : index
    %c514 = arith.constant 514 : index
    %196 = vector.load %arg5[%c0_152, %c0_153, %c514] : memref<2x8x1024xf32, #tpu.memory_space<vmem>>, vector<2x8x128xf32>
    %c0_154 = arith.constant 0 : index
    %c2048 = arith.constant 2048 : index
    %197 = vector.load %arg1[%c0_154, %c2048] : memref<8x3584xf32, #tpu.memory_space<vmem>>, vector<8x128xf32>
    %198 = arith.addf %195, %196 : vector<2x8x128xf32>
    %199 = vector.shape_cast %197 : vector<8x128xf32> to vector<1x8x128xf32>
    %200 = vector.broadcast %199 : vector<1x8x128xf32> to vector<2x8x128xf32>
    %201 = arith.addf %198, %200 : vector<2x8x128xf32>
    %202 = arith.maximumf %194, %201 : vector<2x8x128xf32>
    %c0_155 = arith.constant 0 : index
    %c0_156 = arith.constant 0 : index
    %c256_157 = arith.constant 256 : index
    %203 = vector.load %arg5[%c0_155, %c0_156, %c256_157] : memref<2x8x1024xf32, #tpu.memory_space<vmem>>, vector<2x8x128xf32>
    %c0_158 = arith.constant 0 : index
    %c0_159 = arith.constant 0 : index
    %c387 = arith.constant 387 : index
    %204 = vector.load %arg5[%c0_158, %c0_159, %c387] : memref<2x8x1024xf32, #tpu.memory_space<vmem>>, vector<2x8x128xf32>
    %c0_160 = arith.constant 0 : index
    %c2176 = arith.constant 2176 : index
    %205 = vector.load %arg1[%c0_160, %c2176] : memref<8x3584xf32, #tpu.memory_space<vmem>>, vector<8x128xf32>
    %206 = arith.addf %203, %204 : vector<2x8x128xf32>
    %207 = vector.shape_cast %205 : vector<8x128xf32> to vector<1x8x128xf32>
    %208 = vector.broadcast %207 : vector<1x8x128xf32> to vector<2x8x128xf32>
    %209 = arith.addf %206, %208 : vector<2x8x128xf32>
    %210 = arith.maximumf %202, %209 : vector<2x8x128xf32>
    %c0_161 = arith.constant 0 : index
    %c0_162 = arith.constant 0 : index
    %c384_163 = arith.constant 384 : index
    %211 = vector.load %arg5[%c0_161, %c0_162, %c384_163] : memref<2x8x1024xf32, #tpu.memory_space<vmem>>, vector<2x8x128xf32>
    %c0_164 = arith.constant 0 : index
    %c0_165 = arith.constant 0 : index
    %c260 = arith.constant 260 : index
    %212 = vector.load %arg5[%c0_164, %c0_165, %c260] : memref<2x8x1024xf32, #tpu.memory_space<vmem>>, vector<2x8x128xf32>
    %c0_166 = arith.constant 0 : index
    %c2304 = arith.constant 2304 : index
    %213 = vector.load %arg1[%c0_166, %c2304] : memref<8x3584xf32, #tpu.memory_space<vmem>>, vector<8x128xf32>
    %214 = arith.addf %211, %212 : vector<2x8x128xf32>
    %215 = vector.shape_cast %213 : vector<8x128xf32> to vector<1x8x128xf32>
    %216 = vector.broadcast %215 : vector<1x8x128xf32> to vector<2x8x128xf32>
    %217 = arith.addf %214, %216 : vector<2x8x128xf32>
    %218 = arith.maximumf %210, %217 : vector<2x8x128xf32>
    %c0_167 = arith.constant 0 : index
    %c0_168 = arith.constant 0 : index
    %c512_169 = arith.constant 512 : index
    %219 = vector.load %arg5[%c0_167, %c0_168, %c512_169] : memref<2x8x1024xf32, #tpu.memory_space<vmem>>, vector<2x8x128xf32>
    %c0_170 = arith.constant 0 : index
    %c0_171 = arith.constant 0 : index
    %c133 = arith.constant 133 : index
    %220 = vector.load %arg5[%c0_170, %c0_171, %c133] : memref<2x8x1024xf32, #tpu.memory_space<vmem>>, vector<2x8x128xf32>
    %c0_172 = arith.constant 0 : index
    %c2432 = arith.constant 2432 : index
    %221 = vector.load %arg1[%c0_172, %c2432] : memref<8x3584xf32, #tpu.memory_space<vmem>>, vector<8x128xf32>
    %222 = arith.addf %219, %220 : vector<2x8x128xf32>
    %223 = vector.shape_cast %221 : vector<8x128xf32> to vector<1x8x128xf32>
    %224 = vector.broadcast %223 : vector<1x8x128xf32> to vector<2x8x128xf32>
    %225 = arith.addf %222, %224 : vector<2x8x128xf32>
    %226 = arith.maximumf %218, %225 : vector<2x8x128xf32>
    %c0_173 = arith.constant 0 : index
    %c0_174 = arith.constant 0 : index
    %c640_175 = arith.constant 640 : index
    %227 = vector.load %arg5[%c0_173, %c0_174, %c640_175] : memref<2x8x1024xf32, #tpu.memory_space<vmem>>, vector<2x8x128xf32>
    %c0_176 = arith.constant 0 : index
    %c0_177 = arith.constant 0 : index
    %c6 = arith.constant 6 : index
    %228 = vector.load %arg5[%c0_176, %c0_177, %c6] : memref<2x8x1024xf32, #tpu.memory_space<vmem>>, vector<2x8x128xf32>
    %c0_178 = arith.constant 0 : index
    %c2560 = arith.constant 2560 : index
    %229 = vector.load %arg1[%c0_178, %c2560] : memref<8x3584xf32, #tpu.memory_space<vmem>>, vector<8x128xf32>
    %230 = arith.addf %227, %228 : vector<2x8x128xf32>
    %231 = vector.shape_cast %229 : vector<8x128xf32> to vector<1x8x128xf32>
    %232 = vector.broadcast %231 : vector<1x8x128xf32> to vector<2x8x128xf32>
    %233 = arith.addf %230, %232 : vector<2x8x128xf32>
    %234 = arith.maximumf %226, %233 : vector<2x8x128xf32>
    %c0_179 = arith.constant 0 : index
    %c0_180 = arith.constant 0 : index
    %c768_181 = arith.constant 768 : index
    %235 = vector.load %arg5[%c0_179, %c0_180, %c768_181] : memref<2x8x1024xf32, #tpu.memory_space<vmem>>, vector<1x8x128xf32>
    %236 = vector.shape_cast %235 : vector<1x8x128xf32> to vector<8x128xf32>
    %237 = vector.extract_strided_slice %234 {offsets = [0, 0, 0], sizes = [1, 8, 128], strides = [1, 1, 1]} : vector<2x8x128xf32> to vector<1x8x128xf32>
    %238 = vector.shape_cast %237 : vector<1x8x128xf32> to vector<8x128xf32>
    %239 = arith.addf %236, %238 : vector<8x128xf32>
    %c0_182 = arith.constant 0 : index
    %c0_183 = arith.constant 0 : index
    %c768_184 = arith.constant 768 : index
    %240 = vector.load %arg5[%c0_182, %c0_183, %c768_184] : memref<2x8x1024xf32, #tpu.memory_space<vmem>>, vector<1x8x128xf32>
    %241 = vector.shape_cast %240 : vector<1x8x128xf32> to vector<8x128xf32>
    %242 = vector.shape_cast %239 : vector<8x128xf32> to vector<1x8x128xf32>
    tpu.vector_store %arg5[%c0_182, %c0_183, %c768_184], %242 {strides = array<i32>} : memref<2x8x1024xf32, #tpu.memory_space<vmem>>, vector<1x8x128xf32>,
    %243 = vector.extract_strided_slice %234 {offsets = [1, 0, 0], sizes = [1, 8, 128], strides = [1, 1, 1]} : vector<2x8x128xf32> to vector<1x8x128xf32>
    %244 = vector.shape_cast %243 : vector<1x8x128xf32> to vector<8x128xf32>
    %c1_185 = arith.constant 1 : index
    %c0_186 = arith.constant 0 : index
    %c768_187 = arith.constant 768 : index
    %245 = vector.load %arg5[%c1_185, %c0_186, %c768_187] : memref<2x8x1024xf32, #tpu.memory_space<vmem>>, vector<1x8x128xf32>
    %246 = vector.shape_cast %245 : vector<1x8x128xf32> to vector<8x128xf32>
    %247 = vector.shape_cast %244 : vector<8x128xf32> to vector<1x8x128xf32>
    tpu.vector_store %arg5[%c1_185, %c0_186, %c768_187], %247 {strides = array<i32>} : memref<2x8x1024xf32, #tpu.memory_space<vmem>>, vector<1x8x128xf32>,
    %c0_188 = arith.constant 0 : index
    %c0_189 = arith.constant 0 : index
    %c0_190 = arith.constant 0 : index
    %248 = vector.load %arg5[%c0_188, %c0_189, %c0_190] : memref<2x8x1024xf32, #tpu.memory_space<vmem>>, vector<2x8x128xf32>
    %c0_191 = arith.constant 0 : index
    %c0_192 = arith.constant 0 : index
    %c769 = arith.constant 769 : index
    %249 = vector.load %arg5[%c0_191, %c0_192, %c769] : memref<2x8x1024xf32, #tpu.memory_space<vmem>>, vector<2x8x128xf32>
    %c0_193 = arith.constant 0 : index
    %c2688 = arith.constant 2688 : index
    %250 = vector.load %arg1[%c0_193, %c2688] : memref<8x3584xf32, #tpu.memory_space<vmem>>, vector<8x128xf32>
    %251 = arith.addf %248, %249 : vector<2x8x128xf32>
    %252 = vector.shape_cast %250 : vector<8x128xf32> to vector<1x8x128xf32>
    %253 = vector.broadcast %252 : vector<1x8x128xf32> to vector<2x8x128xf32>
    %254 = arith.addf %251, %253 : vector<2x8x128xf32>
    %c0_194 = arith.constant 0 : index
    %c0_195 = arith.constant 0 : index
    %c128_196 = arith.constant 128 : index
    %255 = vector.load %arg5[%c0_194, %c0_195, %c128_196] : memref<2x8x1024xf32, #tpu.memory_space<vmem>>, vector<2x8x128xf32>
    %c0_197 = arith.constant 0 : index
    %c0_198 = arith.constant 0 : index
    %c642 = arith.constant 642 : index
    %256 = vector.load %arg5[%c0_197, %c0_198, %c642] : memref<2x8x1024xf32, #tpu.memory_space<vmem>>, vector<2x8x128xf32>
    %c0_199 = arith.constant 0 : index
    %c2816 = arith.constant 2816 : index
    %257 = vector.load %arg1[%c0_199, %c2816] : memref<8x3584xf32, #tpu.memory_space<vmem>>, vector<8x128xf32>
    %258 = arith.addf %255, %256 : vector<2x8x128xf32>
    %259 = vector.shape_cast %257 : vector<8x128xf32> to vector<1x8x128xf32>
    %260 = vector.broadcast %259 : vector<1x8x128xf32> to vector<2x8x128xf32>
    %261 = arith.addf %258, %260 : vector<2x8x128xf32>
    %262 = arith.maximumf %254, %261 : vector<2x8x128xf32>
    %c0_200 = arith.constant 0 : index
    %c0_201 = arith.constant 0 : index
    %c256_202 = arith.constant 256 : index
    %263 = vector.load %arg5[%c0_200, %c0_201, %c256_202] : memref<2x8x1024xf32, #tpu.memory_space<vmem>>, vector<2x8x128xf32>
    %c0_203 = arith.constant 0 : index
    %c0_204 = arith.constant 0 : index
    %c515 = arith.constant 515 : index
    %264 = vector.load %arg5[%c0_203, %c0_204, %c515] : memref<2x8x1024xf32, #tpu.memory_space<vmem>>, vector<2x8x128xf32>
    %c0_205 = arith.constant 0 : index
    %c2944 = arith.constant 2944 : index
    %265 = vector.load %arg1[%c0_205, %c2944] : memref<8x3584xf32, #tpu.memory_space<vmem>>, vector<8x128xf32>
    %266 = arith.addf %263, %264 : vector<2x8x128xf32>
    %267 = vector.shape_cast %265 : vector<8x128xf32> to vector<1x8x128xf32>
    %268 = vector.broadcast %267 : vector<1x8x128xf32> to vector<2x8x128xf32>
    %269 = arith.addf %266, %268 : vector<2x8x128xf32>
    %270 = arith.maximumf %262, %269 : vector<2x8x128xf32>
    %c0_206 = arith.constant 0 : index
    %c0_207 = arith.constant 0 : index
    %c384_208 = arith.constant 384 : index
    %271 = vector.load %arg5[%c0_206, %c0_207, %c384_208] : memref<2x8x1024xf32, #tpu.memory_space<vmem>>, vector<2x8x128xf32>
    %c0_209 = arith.constant 0 : index
    %c0_210 = arith.constant 0 : index
    %c388 = arith.constant 388 : index
    %272 = vector.load %arg5[%c0_209, %c0_210, %c388] : memref<2x8x1024xf32, #tpu.memory_space<vmem>>, vector<2x8x128xf32>
    %c0_211 = arith.constant 0 : index
    %c3072 = arith.constant 3072 : index
    %273 = vector.load %arg1[%c0_211, %c3072] : memref<8x3584xf32, #tpu.memory_space<vmem>>, vector<8x128xf32>
    %274 = arith.addf %271, %272 : vector<2x8x128xf32>
    %275 = vector.shape_cast %273 : vector<8x128xf32> to vector<1x8x128xf32>
    %276 = vector.broadcast %275 : vector<1x8x128xf32> to vector<2x8x128xf32>
    %277 = arith.addf %274, %276 : vector<2x8x128xf32>
    %278 = arith.maximumf %270, %277 : vector<2x8x128xf32>
    %c0_212 = arith.constant 0 : index
    %c0_213 = arith.constant 0 : index
    %c512_214 = arith.constant 512 : index
    %279 = vector.load %arg5[%c0_212, %c0_213, %c512_214] : memref<2x8x1024xf32, #tpu.memory_space<vmem>>, vector<2x8x128xf32>
    %c0_215 = arith.constant 0 : index
    %c0_216 = arith.constant 0 : index
    %c261 = arith.constant 261 : index
    %280 = vector.load %arg5[%c0_215, %c0_216, %c261] : memref<2x8x1024xf32, #tpu.memory_space<vmem>>, vector<2x8x128xf32>
    %c0_217 = arith.constant 0 : index
    %c3200 = arith.constant 3200 : index
    %281 = vector.load %arg1[%c0_217, %c3200] : memref<8x3584xf32, #tpu.memory_space<vmem>>, vector<8x128xf32>
    %282 = arith.addf %279, %280 : vector<2x8x128xf32>
    %283 = vector.shape_cast %281 : vector<8x128xf32> to vector<1x8x128xf32>
    %284 = vector.broadcast %283 : vector<1x8x128xf32> to vector<2x8x128xf32>
    %285 = arith.addf %282, %284 : vector<2x8x128xf32>
    %286 = arith.maximumf %278, %285 : vector<2x8x128xf32>
    %c0_218 = arith.constant 0 : index
    %c0_219 = arith.constant 0 : index
    %c640_220 = arith.constant 640 : index
    %287 = vector.load %arg5[%c0_218, %c0_219, %c640_220] : memref<2x8x1024xf32, #tpu.memory_space<vmem>>, vector<2x8x128xf32>
    %c0_221 = arith.constant 0 : index
    %c0_222 = arith.constant 0 : index
    %c134 = arith.constant 134 : index
    %288 = vector.load %arg5[%c0_221, %c0_222, %c134] : memref<2x8x1024xf32, #tpu.memory_space<vmem>>, vector<2x8x128xf32>
    %c0_223 = arith.constant 0 : index
    %c3328 = arith.constant 3328 : index
    %289 = vector.load %arg1[%c0_223, %c3328] : memref<8x3584xf32, #tpu.memory_space<vmem>>, vector<8x128xf32>
    %290 = arith.addf %287, %288 : vector<2x8x128xf32>
    %291 = vector.shape_cast %289 : vector<8x128xf32> to vector<1x8x128xf32>
    %292 = vector.broadcast %291 : vector<1x8x128xf32> to vector<2x8x128xf32>
    %293 = arith.addf %290, %292 : vector<2x8x128xf32>
    %294 = arith.maximumf %286, %293 : vector<2x8x128xf32>
    %c0_224 = arith.constant 0 : index
    %c0_225 = arith.constant 0 : index
    %c768_226 = arith.constant 768 : index
    %295 = vector.load %arg5[%c0_224, %c0_225, %c768_226] : memref<2x8x1024xf32, #tpu.memory_space<vmem>>, vector<2x8x128xf32>
    %c0_227 = arith.constant 0 : index
    %c0_228 = arith.constant 0 : index
    %c7 = arith.constant 7 : index
    %296 = vector.load %arg5[%c0_227, %c0_228, %c7] : memref<2x8x1024xf32, #tpu.memory_space<vmem>>, vector<2x8x128xf32>
    %c0_229 = arith.constant 0 : index
    %c3456 = arith.constant 3456 : index
    %297 = vector.load %arg1[%c0_229, %c3456] : memref<8x3584xf32, #tpu.memory_space<vmem>>, vector<8x128xf32>
    %298 = arith.addf %295, %296 : vector<2x8x128xf32>
    %299 = vector.shape_cast %297 : vector<8x128xf32> to vector<1x8x128xf32>
    %300 = vector.broadcast %299 : vector<1x8x128xf32> to vector<2x8x128xf32>
    %301 = arith.addf %298, %300 : vector<2x8x128xf32>
    %302 = arith.maximumf %294, %301 : vector<2x8x128xf32>
    %c0_230 = arith.constant 0 : index
    %c0_231 = arith.constant 0 : index
    %c896_232 = arith.constant 896 : index
    %303 = vector.load %arg5[%c0_230, %c0_231, %c896_232] : memref<2x8x1024xf32, #tpu.memory_space<vmem>>, vector<1x8x128xf32>
    %304 = vector.shape_cast %303 : vector<1x8x128xf32> to vector<8x128xf32>
    %305 = vector.extract_strided_slice %302 {offsets = [0, 0, 0], sizes = [1, 8, 128], strides = [1, 1, 1]} : vector<2x8x128xf32> to vector<1x8x128xf32>
    %306 = vector.shape_cast %305 : vector<1x8x128xf32> to vector<8x128xf32>
    %307 = arith.addf %304, %306 : vector<8x128xf32>
    %c0_233 = arith.constant 0 : index
    %c0_234 = arith.constant 0 : index
    %c896_235 = arith.constant 896 : index
    %308 = vector.load %arg5[%c0_233, %c0_234, %c896_235] : memref<2x8x1024xf32, #tpu.memory_space<vmem>>, vector<1x8x128xf32>
    %309 = vector.shape_cast %308 : vector<1x8x128xf32> to vector<8x128xf32>
    %310 = vector.shape_cast %307 : vector<8x128xf32> to vector<1x8x128xf32>
    tpu.vector_store %arg5[%c0_233, %c0_234, %c896_235], %310 {strides = array<i32>} : memref<2x8x1024xf32, #tpu.memory_space<vmem>>, vector<1x8x128xf32>,
    %311 = vector.extract_strided_slice %302 {offsets = [1, 0, 0], sizes = [1, 8, 128], strides = [1, 1, 1]} : vector<2x8x128xf32> to vector<1x8x128xf32>
    %312 = vector.shape_cast %311 : vector<1x8x128xf32> to vector<8x128xf32>
    %c1_236 = arith.constant 1 : index
    %c0_237 = arith.constant 0 : index
    %c896_238 = arith.constant 896 : index
    %313 = vector.load %arg5[%c1_236, %c0_237, %c896_238] : memref<2x8x1024xf32, #tpu.memory_space<vmem>>, vector<1x8x128xf32>
    %314 = vector.shape_cast %313 : vector<1x8x128xf32> to vector<8x128xf32>
    %315 = vector.shape_cast %312 : vector<8x128xf32> to vector<1x8x128xf32>
    tpu.vector_store %arg5[%c1_236, %c0_237, %c896_238], %315 {strides = array<i32>} : memref<2x8x1024xf32, #tpu.memory_space<vmem>>, vector<1x8x128xf32>,
    %c0_239 = arith.constant 0 : index
    %c0_240 = arith.constant 0 : index
    %c896_241 = arith.constant 896 : index
    %316 = vector.load %arg5[%c0_239, %c0_240, %c896_241] : memref<2x8x1024xf32, #tpu.memory_space<vmem>>, vector<1x8x1xf32>
    %317 = vector.shape_cast %316 : vector<1x8x1xf32> to vector<8x1xf32>
    %c1_242 = arith.constant 1 : index
    %c0_243 = arith.constant 0 : index
    %c896_244 = arith.constant 896 : index
    %318 = vector.load %arg5[%c1_242, %c0_243, %c896_244] : memref<2x8x1024xf32, #tpu.memory_space<vmem>>, vector<1x8x1xf32>
    %319 = vector.shape_cast %318 : vector<1x8x1xf32> to vector<8x1xf32>
    %320 = arith.subf %319, %317 : vector<8x1xf32>
    %321 = math.absf %320 : vector<8x1xf32>
    %cst_245 = arith.constant 1.000000e-03 : f32
    %322 = vector.broadcast %cst_245 : f32 to vector<8x1xf32>
    %323 = arith.cmpf oge, %321, %322 : vector<8x1xf32>
    %324 = arith.extui %323 : vector<8x1xi1> to vector<8x1xi32>
    %325 = arith.sitofp %324 : vector<8x1xi32> to vector<8x1xf32>
    %cst_246 = arith.constant 1.000000e+00 : f32
    %326 = vector.broadcast %cst_246 : f32 to vector<8x1xf32>
    %327 = arith.addf %326, %320 : vector<8x1xf32>
    %cst_247 = arith.constant 0.000000e+00 : f32
    %328 = vector.broadcast %cst_247 : f32 to vector<8x1xf32>
    %329 = arith.maximumf %327, %328 : vector<8x1xf32>
    %330 = arith.mulf %329, %325 : vector<8x1xf32>
    %c0_248 = arith.constant 0 : index
    %c0_249 = arith.constant 0 : index
    %331 = vector.load %arg3[%c0_248, %c0_249] : memref<8x1xf32, #tpu.memory_space<vmem>>, vector<8x1xf32>
    tpu.vector_store %arg3[%c0_248, %c0_249], %330 {strides = array<i32>} : memref<8x1xf32, #tpu.memory_space<vmem>>, vector<8x1xf32>,
    %c0_250 = arith.constant 0 : index
    %c0_251 = arith.constant 0 : index
    %332 = vector.load %arg4[%c0_250, %c0_251] : memref<8x1xf32, #tpu.memory_space<vmem>>, vector<8x1xf32>
    tpu.vector_store %arg4[%c0_250, %c0_251], %325 {strides = array<i32>} : memref<8x1xf32, #tpu.memory_space<vmem>>, vector<8x1xf32>,
    return
  }
  func.func @transform_0(%arg0: i32) -> (i32, i32) {
    %c0_i32 = arith.constant 0 : i32
    %c0_i32_0 = arith.constant 0 : i32
    return %arg0, %c0_i32 : i32, i32
  }
  func.func @transform_1(%arg0: i32) -> (i32, i32) {
    %c0_i32 = arith.constant 0 : i32
    %c0_i32_0 = arith.constant 0 : i32
    return %arg0, %c0_i32 : i32, i32
  }
  func.func @transform_2(%arg0: i32) -> (i32, i32) {
    %c0_i32 = arith.constant 0 : i32
    %c0_i32_0 = arith.constant 0 : i32
    return %arg0, %c0_i32 : i32, i32
  }
  func.func @transform_3(%arg0: i32) -> (i32, i32) {
    %c0_i32 = arith.constant 0 : i32
    %c0_i32_0 = arith.constant 0 : i32
    return %arg0, %c0_i32 : i32, i32
  }
}

</mosaic_0001>

<llo_original>
// kernel: tpu_custom_call.1
$region0: #{tpu_custom_call.1}
  #allocation0 [shape = 'u32[]', space=smem, size = 0x4, offset = 0x4, fixed_abs, tag = 'smem constant byte address 0x4 - core index']
  #allocation1 [shape = 'u32[144,128]{1,0:T(1,128)}', space=vmem, size = 0x12000, scoped, tag = 'internal scratch']
  #allocation2 [shape = 'f32[2,8,1024]{2,1,0:T(8,128)}', space=vmem, size = 0x10000, scoped, tag = 'scratch operand']
  %s0 = inlined_call_operand.hbm [shape: f32[8,3584], index: 0, kind: input, shape index: {}]
  %s1 = inlined_call_operand.hbm [shape: f32[8,1024], index: 1, kind: input, shape index: {}]
  %s2 = inlined_call_operand.vmem [shape: f32[8,1], index: 2, kind: output, shape index: {0}]
  %s3 = inlined_call_operand.vmem [shape: f32[8,1], index: 3, kind: output, shape index: {1}]
  %4 = xla_tuple %s2, %s3
  %s5 = sld [smem:[#allocation0]]
  $region34: #{tpu_custom_call.1} parent=0
    _
  %s7 = ssub.s32 1, %s5
  %s8 = scalar_select 0, %s7, %s5
  $region1: #{tpu_custom_call.1} parent=0
    #allocation3 [shape = 'u8[114688]{0}', space=vmem, size = 0x1c000, scoped, tag = 'input window, operand 0, single buffered']
    #allocation4 [shape = 's32[1]{0}', space=sflag, size = 0x4, scoped, tag = 'scoped memory for tpu_custom_call.1']
    #allocation5 [shape = 'u8[32768]{0}', space=vmem, size = 0x8000, scoped, tag = 'input window, operand 1, single buffered']
    #allocation6 [shape = 's32[1]{0}', space=sflag, size = 0x4, scoped, tag = 'scoped memory for tpu_custom_call.1']
    %9 = vsyncpa [#allocation4], 0
    %10 = vsyncpa [#allocation6], 0
    // Predicated region
    $region2: #{tpu_custom_call.1} parent=1 // pred_check
      _
    $region3: #{tpu_custom_call.1} parent=1 // pred_check_branch
      %12 = sbr.rel (0) target = $region5
    $region4: #{tpu_custom_call.1} parent=1 // pred_region
      %s14 = ssub.s32 3584, 3584
      %15 = vsyncadd [#allocation4], %s14
      %s17 = sshll.u32 [#allocation3], 4
      %s18 = int_to_ptr.vmem [resolvable:$true] %s17
      %20 = dma.hbm_to_vmem [thread:$0]  %s0, 3584, %s18, [#allocation4]
    $region5: #{tpu_custom_call.1} parent=1 // pred_fallthru
      _
    // Predicated region
    $region6: #{tpu_custom_call.1} parent=1 // pred_check
      _
    $region7: #{tpu_custom_call.1} parent=1 // pred_check_branch
      %22 = sbr.rel (0) target = $region9
    $region8: #{tpu_custom_call.1} parent=1 // pred_region
      %s24 = ssub.s32 1024, 1024
      %25 = vsyncadd [#allocation6], %s24
      %s27 = sshll.u32 [#allocation5], 4
      %s28 = int_to_ptr.vmem [resolvable:$true] %s27
      %30 = dma.hbm_to_vmem [thread:$0]  %s1, 1024, %s28, [#allocation6]
    $region9: #{tpu_custom_call.1} parent=1 // pred_fallthru
      _
    // Predicated region
    $region10: #{tpu_custom_call.1} parent=1 // pred_check
      _
    $region11: #{tpu_custom_call.1} parent=1 // pred_check_branch
      %32 = sbr.rel (0) target = $region13
    $region12: #{tpu_custom_call.1} parent=1 // pred_region
      %33 = dma.done [#allocation4], 3584
    $region13: #{tpu_custom_call.1} parent=1 // pred_fallthru
      _
    // Predicated region
    $region14: #{tpu_custom_call.1} parent=1 // pred_check
      _
    $region15: #{tpu_custom_call.1} parent=1 // pred_check_branch
      %35 = sbr.rel (0) target = $region17
    $region16: #{tpu_custom_call.1} parent=1 // pred_region
      %36 = dma.done [#allocation6], 1024
    $region17: #{tpu_custom_call.1} parent=1 // pred_fallthru
      _
    %v37 = vld [vmem:[#allocation5] sm:$0xff]
    %v38 = vld [vmem:[#allocation5 + $0x8] sm:$0xff]
    %v39 = vld [vmem:[#allocation5 + $0x10] sm:$0xff]
    %v40 = vld [vmem:[#allocation5 + $0x18] sm:$0xff]
    %v41 = vld [vmem:[#allocation5 + $0x20] sm:$0xff]
    %v42 = vld [vmem:[#allocation5 + $0x28] sm:$0xff]
    %v43 = vld [vmem:[#allocation5 + $0x30] sm:$0xff]
    %v44 = vld [vmem:[#allocation5 + $0x38] sm:$0xff]
    %45 = vst [vmem:[#allocation2] sm:$0xff] %v37
    %46 = vst [vmem:[#allocation2 + $0x8] sm:$0xff] %v38
    %47 = vst [vmem:[#allocation2 + $0x10] sm:$0xff] %v39
    %48 = vst [vmem:[#allocation2 + $0x18] sm:$0xff] %v40
    %49 = vst [vmem:[#allocation2 + $0x20] sm:$0xff] %v41
    %50 = vst [vmem:[#allocation2 + $0x28] sm:$0xff] %v42
    %51 = vst [vmem:[#allocation2 + $0x30] sm:$0xff] %v43
    %52 = vst [vmem:[#allocation2 + $0x38] sm:$0xff] %v44
    %s53 = scalar_lea.vmem [#allocation2], 64
    %54 = vst [vmem:[%s53] sm:$0xff] 0.0
    %55 = vst [vmem:[%s53 + $0x8] sm:$0xff] 0.0
    %56 = vst [vmem:[%s53 + $0x10] sm:$0xff] 0.0
    %57 = vst [vmem:[%s53 + $0x18] sm:$0xff] 0.0
    %58 = vst [vmem:[%s53 + $0x20] sm:$0xff] 0.0
    %59 = vst [vmem:[%s53 + $0x28] sm:$0xff] 0.0
    %60 = vst [vmem:[%s53 + $0x30] sm:$0xff] 0.0
    %61 = vst [vmem:[%s53 + $0x38] sm:$0xff] 0.0
    %v62 = vld [vmem:[#allocation2] sm:$0xff]
    %v63 = vld [vmem:[#allocation2 + $0x40] sm:$0xff]
    %v64 = vld [vmem:[#allocation2 + $0x8] sm:$0xff]
    %v65 = vld [vmem:[#allocation2 + $0x48] sm:$0xff]
    %v66 = vld [vmem:[#allocation3] sm:$0xff]
    %71 = vrot.lane.b32.xlu0 %v62, 127
    %v72 = vpop.permute.xlu0 %71
    %73 = vrot.lane.b32.xlu0 %v64, 127
    %v74 = vpop.permute.xlu0 %73
    %75 = vrot.lane.b32.xlu0 %v63, 127
    %v76 = vpop.permute.xlu0 %75
    %77 = vrot.lane.b32.xlu0 %v65, 127
    %v78 = vpop.permute.xlu0 %77
    %vm79 = vcmask 1039360
    %v80 = vsel %vm79, %v72, %v74
    %v81 = vsel %vm79, %v76, %v78
    %v84 = vadd.f32 %v62, %v80
    %v85 = vadd.f32 %v63, %v81
    %v86 = vadd.f32 %v84, %v66
    %v87 = vadd.f32 %v85, %v66
    %v88 = vadd.f32 %v64, %v86
    %89 = vst [vmem:[#allocation2 + $0x8] sm:$0xff] %v88
    %90 = vst [vmem:[%s53 + $0x8] sm:$0xff] %v87
    %v91 = vld [vmem:[#allocation2] sm:$0xff]
    %v92 = vld [vmem:[#allocation2 + $0x40] sm:$0xff]
    %v93 = vld [vmem:[#allocation2 + $0x8] sm:$0xff]
    %v94 = vld [vmem:[#allocation2 + $0x10] sm:$0xff]
    %v95 = vld [vmem:[#allocation2 + $0x48] sm:$0xff]
    %v96 = vld [vmem:[#allocation2 + $0x50] sm:$0xff]
    %v97 = vld [vmem:[#allocation3 + $0x8] sm:$0xff]
    %102 = vrot.lane.b32.xlu0 %v93, 127
    %v103 = vpop.permute.xlu0 %102
    %104 = vrot.lane.b32.xlu0 %v94, 127
    %v105 = vpop.permute.xlu0 %104
    %106 = vrot.lane.b32.xlu0 %v95, 127
    %v107 = vpop.permute.xlu0 %106
    %108 = vrot.lane.b32.xlu0 %v96, 127
    %v109 = vpop.permute.xlu0 %108
    %v110 = vsel %vm79, %v103, %v105
    %v111 = vsel %vm79, %v107, %v109
    %v114 = vadd.f32 %v91, %v110
    %v115 = vadd.f32 %v92, %v111
    %v116 = vadd.f32 %v114, %v97
    %v117 = vadd.f32 %v115, %v97
    %v118 = vld [vmem:[#allocation3 + $0x10] sm:$0xff]
    %121 = vrot.lane.b32.xlu0 %v91, 126
    %v122 = vpop.permute.xlu0 %121
    %123 = vrot.lane.b32.xlu0 %v93, 126
    %v124 = vpop.permute.xlu0 %123
    %125 = vrot.lane.b32.xlu0 %v92, 126
    %v126 = vpop.permute.xlu0 %125
    %127 = vrot.lane.b32.xlu0 %v95, 126
    %v128 = vpop.permute.xlu0 %127
    %vm129 = vcmask 1031168
    %v130 = vsel %vm129, %v122, %v124
    %v131 = vsel %vm129, %v126, %v128
    %v134 = vadd.f32 %v93, %v130
    %v135 = vadd.f32 %v95, %v131
    %v136 = vadd.f32 %v134, %v118
    %v137 = vadd.f32 %v135, %v118
    %v138 = vmax.f32 %v116, %v136
    %v139 = vmax.f32 %v117, %v137
    %v140 = vadd.f32 %v94, %v138
    %141 = vst [vmem:[#allocation2 + $0x10] sm:$0xff] %v140
    %142 = vst [vmem:[%s53 + $0x10] sm:$0xff] %v139
    %v143 = vld [vmem:[#allocation2] sm:$0xff]
    %v144 = vld [vmem:[#allocation2 + $0x40] sm:$0xff]
    %v145 = vld [vmem:[#allocation2 + $0x10] sm:$0xff]
    %v146 = vld [vmem:[#allocation2 + $0x18] sm:$0xff]
    %v147 = vld [vmem:[#allocation2 + $0x50] sm:$0xff]
    %v148 = vld [vmem:[#allocation2 + $0x58] sm:$0xff]
    %v149 = vld [vmem:[#allocation3 + $0x18] sm:$0xff]
    %154 = vrot.lane.b32.xlu0 %v145, 127
    %v155 = vpop.permute.xlu0 %154
    %156 = vrot.lane.b32.xlu0 %v146, 127
    %v157 = vpop.permute.xlu0 %156
    %158 = vrot.lane.b32.xlu0 %v147, 127
    %v159 = vpop.permute.xlu0 %158
    %160 = vrot.lane.b32.xlu0 %v148, 127
    %v161 = vpop.permute.xlu0 %160
    %v162 = vsel %vm79, %v155, %v157
    %v163 = vsel %vm79, %v159, %v161
    %v166 = vadd.f32 %v143, %v162
    %v167 = vadd.f32 %v144, %v163
    %v168 = vadd.f32 %v166, %v149
    %v169 = vadd.f32 %v167, %v149
    %v170 = vld [vmem:[#allocation2 + $0x8] sm:$0xff]
    %v171 = vld [vmem:[#allocation2 + $0x48] sm:$0xff]
    %v172 = vld [vmem:[#allocation3 + $0x20] sm:$0xff]
    %175 = vrot.lane.b32.xlu0 %v170, 126
    %v176 = vpop.permute.xlu0 %175
    %177 = vrot.lane.b32.xlu0 %v145, 126
    %v178 = vpop.permute.xlu0 %177
    %179 = vrot.lane.b32.xlu0 %v171, 126
    %v180 = vpop.permute.xlu0 %179
    %181 = vrot.lane.b32.xlu0 %v147, 126
    %v182 = vpop.permute.xlu0 %181
    %v183 = vsel %vm129, %v176, %v178
    %v184 = vsel %vm129, %v180, %v182
    %v187 = vadd.f32 %v170, %v183
    %v188 = vadd.f32 %v171, %v184
    %v189 = vadd.f32 %v187, %v172
    %v190 = vadd.f32 %v188, %v172
    %v191 = vmax.f32 %v168, %v189
    %v192 = vmax.f32 %v169, %v190
    %v193 = vld [vmem:[#allocation3 + $0x28] sm:$0xff]
    %196 = vrot.lane.b32.xlu0 %v143, 125
    %v197 = vpop.permute.xlu0 %196
    %198 = vrot.lane.b32.xlu0 %v170, 125
    %v199 = vpop.permute.xlu0 %198
    %200 = vrot.lane.b32.xlu0 %v144, 125
    %v201 = vpop.permute.xlu0 %200
    %202 = vrot.lane.b32.xlu0 %v171, 125
    %v203 = vpop.permute.xlu0 %202
    %vm204 = vcmask 1022976
    %v205 = vsel %vm204, %v197, %v199
    %v206 = vsel %vm204, %v201, %v203
    %v209 = vadd.f32 %v145, %v205
    %v210 = vadd.f32 %v147, %v206
    %v211 = vadd.f32 %v209, %v193
    %v212 = vadd.f32 %v210, %v193
    %v213 = vmax.f32 %v191, %v211
    %v214 = vmax.f32 %v192, %v212
    %v215 = vadd.f32 %v146, %v213
    %216 = vst [vmem:[#allocation2 + $0x18] sm:$0xff] %v215
    %217 = vst [vmem:[%s53 + $0x18] sm:$0xff] %v214
    %v218 = vld [vmem:[#allocation2] sm:$0xff]
    %v219 = vld [vmem:[#allocation2 + $0x40] sm:$0xff]
    %v220 = vld [vmem:[#allocation2 + $0x18] sm:$0xff]
    %v221 = vld [vmem:[#allocation2 + $0x20] sm:$0xff]
    %v222 = vld [vmem:[#allocation2 + $0x58] sm:$0xff]
    %v223 = vld [vmem:[#allocation2 + $0x60] sm:$0xff]
    %v224 = vld [vmem:[#allocation3 + $0x30] sm:$0xff]
    %229 = vrot.lane.b32.xlu0 %v220, 127
    %v230 = vpop.permute.xlu0 %229
    %231 = vrot.lane.b32.xlu0 %v221, 127
    %v232 = vpop.permute.xlu0 %231
    %233 = vrot.lane.b32.xlu0 %v222, 127
    %v234 = vpop.permute.xlu0 %233
    %235 = vrot.lane.b32.xlu0 %v223, 127
    %v236 = vpop.permute.xlu0 %235
    %v237 = vsel %vm79, %v230, %v232
    %v238 = vsel %vm79, %v234, %v236
    %v241 = vadd.f32 %v218, %v237
    %v242 = vadd.f32 %v219, %v238
    %v243 = vadd.f32 %v241, %v224
    %v244 = vadd.f32 %v242, %v224
    %v245 = vld [vmem:[#allocation2 + $0x8] sm:$0xff]
    %v246 = vld [vmem:[#allocation2 + $0x48] sm:$0xff]
    %v247 = vld [vmem:[#allocation2 + $0x10] sm:$0xff]
    %v248 = vld [vmem:[#allocation2 + $0x50] sm:$0xff]
    %v249 = vld [vmem:[#allocation3 + $0x38] sm:$0xff]
    %252 = vrot.lane.b32.xlu0 %v247, 126
    %v253 = vpop.permute.xlu0 %252
    %254 = vrot.lane.b32.xlu0 %v220, 126
    %v255 = vpop.permute.xlu0 %254
    %256 = vrot.lane.b32.xlu0 %v248, 126
    %v257 = vpop.permute.xlu0 %256
    %258 = vrot.lane.b32.xlu0 %v222, 126
    %v259 = vpop.permute.xlu0 %258
    %v260 = vsel %vm129, %v253, %v255
    %v261 = vsel %vm129, %v257, %v259
    %v264 = vadd.f32 %v245, %v260
    %v265 = vadd.f32 %v246, %v261
    %v266 = vadd.f32 %v264, %v249
    %v267 = vadd.f32 %v265, %v249
    %v268 = vmax.f32 %v243, %v266
    %v269 = vmax.f32 %v244, %v267
    %v270 = vld [vmem:[#allocation3 + $0x40] sm:$0xff]
    %273 = vrot.lane.b32.xlu0 %v245, 125
    %v274 = vpop.permute.xlu0 %273
    %275 = vrot.lane.b32.xlu0 %v247, 125
    %v276 = vpop.permute.xlu0 %275
    %277 = vrot.lane.b32.xlu0 %v246, 125
    %v278 = vpop.permute.xlu0 %277
    %279 = vrot.lane.b32.xlu0 %v248, 125
    %v280 = vpop.permute.xlu0 %279
    %v281 = vsel %vm204, %v274, %v276
    %v282 = vsel %vm204, %v278, %v280
    %v285 = vadd.f32 %v247, %v281
    %v286 = vadd.f32 %v248, %v282
    %v287 = vadd.f32 %v285, %v270
    %v288 = vadd.f32 %v286, %v270
    %v289 = vmax.f32 %v268, %v287
    %v290 = vmax.f32 %v269, %v288
    %v291 = vld [vmem:[#allocation3 + $0x48] sm:$0xff]
    %294 = vrot.lane.b32.xlu0 %v218, 124
    %v295 = vpop.permute.xlu0 %294
    %296 = vrot.lane.b32.xlu0 %v245, 124
    %v297 = vpop.permute.xlu0 %296
    %298 = vrot.lane.b32.xlu0 %v219, 124
    %v299 = vpop.permute.xlu0 %298
    %300 = vrot.lane.b32.xlu0 %v246, 124
    %v301 = vpop.permute.xlu0 %300
    %vm302 = vcmask 1014784
    %v303 = vsel %vm302, %v295, %v297
    %v304 = vsel %vm302, %v299, %v301
    %v307 = vadd.f32 %v220, %v303
    %v308 = vadd.f32 %v222, %v304
    %v309 = vadd.f32 %v307, %v291
    %v310 = vadd.f32 %v308, %v291
    %v311 = vmax.f32 %v289, %v309
    %v312 = vmax.f32 %v290, %v310
    %v313 = vadd.f32 %v221, %v311
    %314 = vst [vmem:[#allocation2 + $0x20] sm:$0xff] %v313
    %315 = vst [vmem:[%s53 + $0x20] sm:$0xff] %v312
    %v316 = vld [vmem:[#allocation2] sm:$0xff]
    %v317 = vld [vmem:[#allocation2 + $0x40] sm:$0xff]
    %v318 = vld [vmem:[#allocation2 + $0x20] sm:$0xff]
    %v319 = vld [vmem:[#allocation2 + $0x28] sm:$0xff]
    %v320 = vld [vmem:[#allocation2 + $0x60] sm:$0xff]
    %v321 = vld [vmem:[#allocation2 + $0x68] sm:$0xff]
    %v322 = vld [vmem:[#allocation3 + $0x50] sm:$0xff]
    %327 = vrot.lane.b32.xlu0 %v318, 127
    %v328 = vpop.permute.xlu0 %327
    %329 = vrot.lane.b32.xlu0 %v319, 127
    %v330 = vpop.permute.xlu0 %329
    %331 = vrot.lane.b32.xlu0 %v320, 127
    %v332 = vpop.permute.xlu0 %331
    %333 = vrot.lane.b32.xlu0 %v321, 127
    %v334 = vpop.permute.xlu0 %333
    %v335 = vsel %vm79, %v328, %v330
    %v336 = vsel %vm79, %v332, %v334
    %v339 = vadd.f32 %v316, %v335
    %v340 = vadd.f32 %v317, %v336
    %v341 = vadd.f32 %v339, %v322
    %v342 = vadd.f32 %v340, %v322
    %v343 = vld [vmem:[#allocation2 + $0x8] sm:$0xff]
    %v344 = vld [vmem:[#allocation2 + $0x48] sm:$0xff]
    %v345 = vld [vmem:[#allocation2 + $0x18] sm:$0xff]
    %v346 = vld [vmem:[#allocation2 + $0x58] sm:$0xff]
    %v347 = vld [vmem:[#allocation3 + $0x58] sm:$0xff]
    %350 = vrot.lane.b32.xlu0 %v345, 126
    %v351 = vpop.permute.xlu0 %350
    %352 = vrot.lane.b32.xlu0 %v318, 126
    %v353 = vpop.permute.xlu0 %352
    %354 = vrot.lane.b32.xlu0 %v346, 126
    %v355 = vpop.permute.xlu0 %354
    %356 = vrot.lane.b32.xlu0 %v320, 126
    %v357 = vpop.permute.xlu0 %356
    %v358 = vsel %vm129, %v351, %v353
    %v359 = vsel %vm129, %v355, %v357
    %v362 = vadd.f32 %v343, %v358
    %v363 = vadd.f32 %v344, %v359
    %v364 = vadd.f32 %v362, %v347
    %v365 = vadd.f32 %v363, %v347
    %v366 = vmax.f32 %v341, %v364
    %v367 = vmax.f32 %v342, %v365
    %v368 = vld [vmem:[#allocation2 + $0x10] sm:$0xff]
    %v369 = vld [vmem:[#allocation2 + $0x50] sm:$0xff]
    %v370 = vld [vmem:[#allocation3 + $0x60] sm:$0xff]
    %373 = vrot.lane.b32.xlu0 %v368, 125
    %v374 = vpop.permute.xlu0 %373
    %375 = vrot.lane.b32.xlu0 %v345, 125
    %v376 = vpop.permute.xlu0 %375
    %377 = vrot.lane.b32.xlu0 %v369, 125
    %v378 = vpop.permute.xlu0 %377
    %379 = vrot.lane.b32.xlu0 %v346, 125
    %v380 = vpop.permute.xlu0 %379
    %v381 = vsel %vm204, %v374, %v376
    %v382 = vsel %vm204, %v378, %v380
    %v385 = vadd.f32 %v368, %v381
    %v386 = vadd.f32 %v369, %v382
    %v387 = vadd.f32 %v385, %v370
    %v388 = vadd.f32 %v386, %v370
    %v389 = vmax.f32 %v366, %v387
    %v390 = vmax.f32 %v367, %v388
    %v391 = vld [vmem:[#allocation3 + $0x68] sm:$0xff]
    %394 = vrot.lane.b32.xlu0 %v343, 124
    %v395 = vpop.permute.xlu0 %394
    %396 = vrot.lane.b32.xlu0 %v368, 124
    %v397 = vpop.permute.xlu0 %396
    %398 = vrot.lane.b32.xlu0 %v344, 124
    %v399 = vpop.permute.xlu0 %398
    %400 = vrot.lane.b32.xlu0 %v369, 124
    %v401 = vpop.permute.xlu0 %400
    %v402 = vsel %vm302, %v395, %v397
    %v403 = vsel %vm302, %v399, %v401
    %v406 = vadd.f32 %v345, %v402
    %v407 = vadd.f32 %v346, %v403
    %v408 = vadd.f32 %v406, %v391
    %v409 = vadd.f32 %v407, %v391
    %v410 = vmax.f32 %v389, %v408
    %v411 = vmax.f32 %v390, %v409
    %v412 = vld [vmem:[#allocation3 + $0x70] sm:$0xff]
    %415 = vrot.lane.b32.xlu0 %v316, 123
    %v416 = vpop.permute.xlu0 %415
    %417 = vrot.lane.b32.xlu0 %v343, 123
    %v418 = vpop.permute.xlu0 %417
    %419 = vrot.lane.b32.xlu0 %v317, 123
    %v420 = vpop.permute.xlu0 %419
    %421 = vrot.lane.b32.xlu0 %v344, 123
    %v422 = vpop.permute.xlu0 %421
    %vm423 = vcmask 1006592
    %v424 = vsel %vm423, %v416, %v418
    %v425 = vsel %vm423, %v420, %v422
    %v428 = vadd.f32 %v318, %v424
    %v429 = vadd.f32 %v320, %v425
    %v430 = vadd.f32 %v428, %v412
    %v431 = vadd.f32 %v429, %v412
    %v432 = vmax.f32 %v410, %v430
    %v433 = vmax.f32 %v411, %v431
    %v434 = vadd.f32 %v319, %v432
    %435 = vst [vmem:[#allocation2 + $0x28] sm:$0xff] %v434
    %436 = vst [vmem:[%s53 + $0x28] sm:$0xff] %v433
    %v437 = vld [vmem:[#allocation2] sm:$0xff]
    %v438 = vld [vmem:[#allocation2 + $0x40] sm:$0xff]
    %v439 = vld [vmem:[#allocation2 + $0x28] sm:$0xff]
    %v440 = vld [vmem:[#allocation2 + $0x30] sm:$0xff]
    %v441 = vld [vmem:[#allocation2 + $0x68] sm:$0xff]
    %v442 = vld [vmem:[#allocation2 + $0x70] sm:$0xff]
    %v443 = vld [vmem:[#allocation3 + $0x78] sm:$0xff]
    %448 = vrot.lane.b32.xlu0 %v439, 127
    %v449 = vpop.permute.xlu0 %448
    %450 = vrot.lane.b32.xlu0 %v440, 127
    %v451 = vpop.permute.xlu0 %450
    %452 = vrot.lane.b32.xlu0 %v441, 127
    %v453 = vpop.permute.xlu0 %452
    %454 = vrot.lane.b32.xlu0 %v442, 127
    %v455 = vpop.permute.xlu0 %454
    %v456 = vsel %vm79, %v449, %v451
    %v457 = vsel %vm79, %v453, %v455
    %v460 = vadd.f32 %v437, %v456
    %v461 = vadd.f32 %v438, %v457
    %v462 = vadd.f32 %v460, %v443
    %v463 = vadd.f32 %v461, %v443
    %v464 = vld [vmem:[#allocation2 + $0x8] sm:$0xff]
    %v465 = vld [vmem:[#allocation2 + $0x48] sm:$0xff]
    %v466 = vld [vmem:[#allocation2 + $0x20] sm:$0xff]
    %v467 = vld [vmem:[#allocation2 + $0x60] sm:$0xff]
    %v468 = vld [vmem:[#allocation3 + $0x80] sm:$0xff]
    %471 = vrot.lane.b32.xlu0 %v466, 126
    %v472 = vpop.permute.xlu0 %471
    %473 = vrot.lane.b32.xlu0 %v439, 126
    %v474 = vpop.permute.xlu0 %473
    %475 = vrot.lane.b32.xlu0 %v467, 126
    %v476 = vpop.permute.xlu0 %475
    %477 = vrot.lane.b32.xlu0 %v441, 126
    %v478 = vpop.permute.xlu0 %477
    %v479 = vsel %vm129, %v472, %v474
    %v480 = vsel %vm129, %v476, %v478
    %v483 = vadd.f32 %v464, %v479
    %v484 = vadd.f32 %v465, %v480
    %v485 = vadd.f32 %v483, %v468
    %v486 = vadd.f32 %v484, %v468
    %v487 = vmax.f32 %v462, %v485
    %v488 = vmax.f32 %v463, %v486
    %v489 = vld [vmem:[#allocation2 + $0x10] sm:$0xff]
    %v490 = vld [vmem:[#allocation2 + $0x50] sm:$0xff]
    %v491 = vld [vmem:[#allocation2 + $0x18] sm:$0xff]
    %v492 = vld [vmem:[#allocation2 + $0x58] sm:$0xff]
    %v493 = vld [vmem:[#allocation3 + $0x88] sm:$0xff]
    %496 = vrot.lane.b32.xlu0 %v491, 125
    %v497 = vpop.permute.xlu0 %496
    %498 = vrot.lane.b32.xlu0 %v466, 125
    %v499 = vpop.permute.xlu0 %498
    %500 = vrot.lane.b32.xlu0 %v492, 125
    %v501 = vpop.permute.xlu0 %500
    %502 = vrot.lane.b32.xlu0 %v467, 125
    %v503 = vpop.permute.xlu0 %502
    %v504 = vsel %vm204, %v497, %v499
    %v505 = vsel %vm204, %v501, %v503
    %v508 = vadd.f32 %v489, %v504
    %v509 = vadd.f32 %v490, %v505
    %v510 = vadd.f32 %v508, %v493
    %v511 = vadd.f32 %v509, %v493
    %v512 = vmax.f32 %v487, %v510
    %v513 = vmax.f32 %v488, %v511
    %v514 = vld [vmem:[#allocation3 + $0x90] sm:$0xff]
    %517 = vrot.lane.b32.xlu0 %v489, 124
    %v518 = vpop.permute.xlu0 %517
    %519 = vrot.lane.b32.xlu0 %v491, 124
    %v520 = vpop.permute.xlu0 %519
    %521 = vrot.lane.b32.xlu0 %v490, 124
    %v522 = vpop.permute.xlu0 %521
    %523 = vrot.lane.b32.xlu0 %v492, 124
    %v524 = vpop.permute.xlu0 %523
    %v525 = vsel %vm302, %v518, %v520
    %v526 = vsel %vm302, %v522, %v524
    %v529 = vadd.f32 %v491, %v525
    %v530 = vadd.f32 %v492, %v526
    %v531 = vadd.f32 %v529, %v514
    %v532 = vadd.f32 %v530, %v514
    %v533 = vmax.f32 %v512, %v531
    %v534 = vmax.f32 %v513, %v532
    %v535 = vld [vmem:[#allocation3 + $0x98] sm:$0xff]
    %538 = vrot.lane.b32.xlu0 %v464, 123
    %v539 = vpop.permute.xlu0 %538
    %540 = vrot.lane.b32.xlu0 %v489, 123
    %v541 = vpop.permute.xlu0 %540
    %542 = vrot.lane.b32.xlu0 %v465, 123
    %v543 = vpop.permute.xlu0 %542
    %544 = vrot.lane.b32.xlu0 %v490, 123
    %v545 = vpop.permute.xlu0 %544
    %v546 = vsel %vm423, %v539, %v541
    %v547 = vsel %vm423, %v543, %v545
    %v550 = vadd.f32 %v466, %v546
    %v551 = vadd.f32 %v467, %v547
    %v552 = vadd.f32 %v550, %v535
    %v553 = vadd.f32 %v551, %v535
    %v554 = vmax.f32 %v533, %v552
    %v555 = vmax.f32 %v534, %v553
    %v556 = vld [vmem:[#allocation3 + $0xa0] sm:$0xff]
    %559 = vrot.lane.b32.xlu0 %v437, 122
    %v560 = vpop.permute.xlu0 %559
    %561 = vrot.lane.b32.xlu0 %v464, 122
    %v562 = vpop.permute.xlu0 %561
    %563 = vrot.lane.b32.xlu0 %v438, 122
    %v564 = vpop.permute.xlu0 %563
    %565 = vrot.lane.b32.xlu0 %v465, 122
    %v566 = vpop.permute.xlu0 %565
    %vm567 = vcmask 998400
    %v568 = vsel %vm567, %v560, %v562
    %v569 = vsel %vm567, %v564, %v566
    %v572 = vadd.f32 %v439, %v568
    %v573 = vadd.f32 %v441, %v569
    %v574 = vadd.f32 %v572, %v556
    %v575 = vadd.f32 %v573, %v556
    %v576 = vmax.f32 %v554, %v574
    %v577 = vmax.f32 %v555, %v575
    %v578 = vadd.f32 %v440, %v576
    %579 = vst [vmem:[#allocation2 + $0x30] sm:$0xff] %v578
    %580 = vst [vmem:[%s53 + $0x30] sm:$0xff] %v577
    %v581 = vld [vmem:[#allocation2] sm:$0xff]
    %v582 = vld [vmem:[#allocation2 + $0x40] sm:$0xff]
    %v583 = vld [vmem:[#allocation2 + $0x30] sm:$0xff]
    %v584 = vld [vmem:[#allocation2 + $0x38] sm:$0xff]
    %v585 = vld [vmem:[#allocation2 + $0x70] sm:$0xff]
    %v586 = vld [vmem:[#allocation2 + $0x78] sm:$0xff]
    %v587 = vld [vmem:[#allocation3 + $0xa8] sm:$0xff]
    %592 = vrot.lane.b32.xlu0 %v583, 127
    %v593 = vpop.permute.xlu0 %592
    %594 = vrot.lane.b32.xlu0 %v584, 127
    %v595 = vpop.permute.xlu0 %594
    %596 = vrot.lane.b32.xlu0 %v585, 127
    %v597 = vpop.permute.xlu0 %596
    %598 = vrot.lane.b32.xlu0 %v586, 127
    %v599 = vpop.permute.xlu0 %598
    %v600 = vsel %vm79, %v593, %v595
    %v601 = vsel %vm79, %v597, %v599
    %v604 = vadd.f32 %v581, %v600
    %v605 = vadd.f32 %v582, %v601
    %v606 = vadd.f32 %v604, %v587
    %v607 = vadd.f32 %v605, %v587
    %v608 = vld [vmem:[#allocation2 + $0x8] sm:$0xff]
    %v609 = vld [vmem:[#allocation2 + $0x48] sm:$0xff]
    %v610 = vld [vmem:[#allocation2 + $0x28] sm:$0xff]
    %v611 = vld [vmem:[#allocation2 + $0x30] sm:$0xff]
    %v612 = vld [vmem:[#allocation2 + $0x68] sm:$0xff]
    %v613 = vld [vmem:[#allocation2 + $0x70] sm:$0xff]
    %v614 = vld [vmem:[#allocation3 + $0xb0] sm:$0xff]
    %619 = vrot.lane.b32.xlu0 %v610, 126
    %v620 = vpop.permute.xlu0 %619
    %621 = vrot.lane.b32.xlu0 %v611, 126
    %v622 = vpop.permute.xlu0 %621
    %623 = vrot.lane.b32.xlu0 %v612, 126
    %v624 = vpop.permute.xlu0 %623
    %625 = vrot.lane.b32.xlu0 %v613, 126
    %v626 = vpop.permute.xlu0 %625
    %v627 = vsel %vm129, %v620, %v622
    %v628 = vsel %vm129, %v624, %v626
    %v631 = vadd.f32 %v608, %v627
    %v632 = vadd.f32 %v609, %v628
    %v633 = vadd.f32 %v631, %v614
    %v634 = vadd.f32 %v632, %v614
    %v635 = vmax.f32 %v606, %v633
    %v636 = vmax.f32 %v607, %v634
    %v637 = vld [vmem:[#allocation2 + $0x10] sm:$0xff]
    %v638 = vld [vmem:[#allocation2 + $0x50] sm:$0xff]
    %v639 = vld [vmem:[#allocation2 + $0x20] sm:$0xff]
    %v640 = vld [vmem:[#allocation2 + $0x60] sm:$0xff]
    %v641 = vld [vmem:[#allocation3 + $0xb8] sm:$0xff]
    %644 = vrot.lane.b32.xlu0 %v639, 125
    %v645 = vpop.permute.xlu0 %644
    %646 = vrot.lane.b32.xlu0 %v610, 125
    %v647 = vpop.permute.xlu0 %646
    %648 = vrot.lane.b32.xlu0 %v640, 125
    %v649 = vpop.permute.xlu0 %648
    %650 = vrot.lane.b32.xlu0 %v612, 125
    %v651 = vpop.permute.xlu0 %650
    %v652 = vsel %vm204, %v645, %v647
    %v653 = vsel %vm204, %v649, %v651
    %v656 = vadd.f32 %v637, %v652
    %v657 = vadd.f32 %v638, %v653
    %v658 = vadd.f32 %v656, %v641
    %v659 = vadd.f32 %v657, %v641
    %v660 = vmax.f32 %v635, %v658
    %v661 = vmax.f32 %v636, %v659
    %v662 = vld [vmem:[#allocation2 + $0x18] sm:$0xff]
    %v663 = vld [vmem:[#allocation2 + $0x58] sm:$0xff]
    %v664 = vld [vmem:[#allocation3 + $0xc0] sm:$0xff]
    %667 = vrot.lane.b32.xlu0 %v662, 124
    %v668 = vpop.permute.xlu0 %667
    %669 = vrot.lane.b32.xlu0 %v639, 124
    %v670 = vpop.permute.xlu0 %669
    %671 = vrot.lane.b32.xlu0 %v663, 124
    %v672 = vpop.permute.xlu0 %671
    %673 = vrot.lane.b32.xlu0 %v640, 124
    %v674 = vpop.permute.xlu0 %673
    %v675 = vsel %vm302, %v668, %v670
    %v676 = vsel %vm302, %v672, %v674
    %v679 = vadd.f32 %v662, %v675
    %v680 = vadd.f32 %v663, %v676
    %v681 = vadd.f32 %v679, %v664
    %v682 = vadd.f32 %v680, %v664
    %v683 = vmax.f32 %v660, %v681
    %v684 = vmax.f32 %v661, %v682
    %v685 = vld [vmem:[#allocation3 + $0xc8] sm:$0xff]
    %688 = vrot.lane.b32.xlu0 %v637, 123
    %v689 = vpop.permute.xlu0 %688
    %690 = vrot.lane.b32.xlu0 %v662, 123
    %v691 = vpop.permute.xlu0 %690
    %692 = vrot.lane.b32.xlu0 %v638, 123
    %v693 = vpop.permute.xlu0 %692
    %694 = vrot.lane.b32.xlu0 %v663, 123
    %v695 = vpop.permute.xlu0 %694
    %v696 = vsel %vm423, %v689, %v691
    %v697 = vsel %vm423, %v693, %v695
    %v700 = vadd.f32 %v639, %v696
    %v701 = vadd.f32 %v640, %v697
    %v702 = vadd.f32 %v700, %v685
    %v703 = vadd.f32 %v701, %v685
    %v704 = vmax.f32 %v683, %v702
    %v705 = vmax.f32 %v684, %v703
    %v706 = vld [vmem:[#allocation3 + $0xd0] sm:$0xff]
    %709 = vrot.lane.b32.xlu0 %v608, 122
    %v710 = vpop.permute.xlu0 %709
    %711 = vrot.lane.b32.xlu0 %v637, 122
    %v712 = vpop.permute.xlu0 %711
    %713 = vrot.lane.b32.xlu0 %v609, 122
    %v714 = vpop.permute.xlu0 %713
    %715 = vrot.lane.b32.xlu0 %v638, 122
    %v716 = vpop.permute.xlu0 %715
    %v717 = vsel %vm567, %v710, %v712
    %v718 = vsel %vm567, %v714, %v716
    %v721 = vadd.f32 %v610, %v717
    %v722 = vadd.f32 %v612, %v718
    %v723 = vadd.f32 %v721, %v706
    %v724 = vadd.f32 %v722, %v706
    %v725 = vmax.f32 %v704, %v723
    %v726 = vmax.f32 %v705, %v724
    %v727 = vld [vmem:[#allocation3 + $0xd8] sm:$0xff]
    %730 = vrot.lane.b32.xlu0 %v581, 121
    %v731 = vpop.permute.xlu0 %730
    %732 = vrot.lane.b32.xlu0 %v608, 121
    %v733 = vpop.permute.xlu0 %732
    %734 = vrot.lane.b32.xlu0 %v582, 121
    %v735 = vpop.permute.xlu0 %734
    %736 = vrot.lane.b32.xlu0 %v609, 121
    %v737 = vpop.permute.xlu0 %736
    %vm738 = vcmask 990208
    %v739 = vsel %vm738, %v731, %v733
    %v740 = vsel %vm738, %v735, %v737
    %v743 = vadd.f32 %v611, %v739
    %v744 = vadd.f32 %v613, %v740
    %v745 = vadd.f32 %v743, %v727
    %v746 = vadd.f32 %v744, %v727
    %v747 = vmax.f32 %v725, %v745
    %v748 = vmax.f32 %v726, %v746
    %v749 = vld [vmem:[#allocation2 + $0x38] sm:$0xff]
    %v750 = vadd.f32 %v749, %v747
    %751 = vst [vmem:[#allocation2 + $0x38] sm:$0xff] %v750
    %752 = vst [vmem:[%s53 + $0x38] sm:$0xff] %v748
    %v753 = vld [vmem:[#allocation2 + $0x38] sm:$0xff]
    %v754 = vld [vmem:[%s53 + $0x38] sm:$0xff]
    %v755 = vsub.f32 %v754, %v753
    %v756 = vand.u32 2147483647, %v755
    %vm757 = vcmp.ge.f32.partialorder %v756, 0.001
    %v758 = vsel %vm757, 1, 0
    %v759 = vcvt.s32.f32 %v758
    %v760 = vadd.f32 %v755, 1.0
    %v761 = vmax.f32 %v760, 0.0
    %v762 = vmul.f32 %v761, %v759
    %vm763 = vcmask 7168
    %764 = vst.msk [vmem:[%s2] sm:$0xff] %vm763, %v762
    %765 = vst.msk [vmem:[%s3] sm:$0xff] %vm763, %v759
    // Predicated region
    $region18: #{tpu_custom_call.1} parent=1 // pred_check
      _
    $region19: #{tpu_custom_call.1} parent=1 // pred_check_branch
      %767 = sbr.rel (0) target = $region21
    $region20: #{tpu_custom_call.1} parent=1 // pred_region
      _
    $region21: #{tpu_custom_call.1} parent=1 // pred_fallthru
      _
    // Predicated region
    $region22: #{tpu_custom_call.1} parent=1 // pred_check
      _
    $region23: #{tpu_custom_call.1} parent=1 // pred_check_branch
      %769 = sbr.rel (0) target = $region25
    $region24: #{tpu_custom_call.1} parent=1 // pred_region
      _
    $region25: #{tpu_custom_call.1} parent=1 // pred_fallthru
      _
    // Predicated region
    $region26: #{tpu_custom_call.1} parent=1 // pred_check
      _
    $region27: #{tpu_custom_call.1} parent=1 // pred_check_branch
      %771 = sbr.rel (0) target = $region29
    $region28: #{tpu_custom_call.1} parent=1 // pred_region
      _
    $region29: #{tpu_custom_call.1} parent=1 // pred_fallthru
      _
    // Predicated region
    $region30: #{tpu_custom_call.1} parent=1 // pred_check
      _
    $region31: #{tpu_custom_call.1} parent=1 // pred_check_branch
      %773 = sbr.rel (0) target = $region33
    $region32: #{tpu_custom_call.1} parent=1 // pred_region
      _
    $region33: #{tpu_custom_call.1} parent=1 // pred_fallthru
      _
    %774 = vsyncpa [#allocation4], 1
    %775 = vsyncpa [#allocation6], 1

</llo_original>
